<compile_context>
chip_gen: v6e
topology: v6e:2x2x1
jax: 0.10.0
libtpu: 0.0.40
codegen_flags: <defaults>
</compile_context>

<pallas_src>
import functools

import numpy as np
import jax
import jax.numpy as jnp
from jax import lax
from jax.experimental import pallas as pl
from jax.experimental.pallas import tpu as pltpu


_LANES = 128   # lane-dense GEMM output width
_CSLOT = 32    # per-parity channel slot for deconv outputs (4 * 32 = 128 lanes)


def _round_up_lanes(n):
    return max(_LANES, ((n + _LANES - 1) // _LANES) * _LANES)


def _vmem_specs(n):
    return [pl.BlockSpec(memory_space=pltpu.MemorySpace.VMEM) for _ in range(n)]


# ----------------------------------------------------------------------------
# Pallas kernels
# ----------------------------------------------------------------------------
def _gemm_act_kernel(x_ref, w_ref, b_ref, o_ref, *, activation):
    acc = jnp.dot(x_ref[...], w_ref[...], preferred_element_type=jnp.float32)
    acc = acc + b_ref[...]
    if activation == "relu":
        acc = jnp.maximum(acc, 0.0)
    elif activation == "sigmoid":
        acc = jax.nn.sigmoid(acc)
    o_ref[...] = acc


def _gemm_bn_relu_kernel(x_ref, w_ref, b_ref, g_ref, bt_ref, o_ref, *, groups, eps):
    """GEMM + bias + BatchNorm(batch stats, per channel) + ReLU.

    Output columns are `groups` slots of C = N // groups channels (groups > 1
    is the 4-phase deconv layout); BN statistics are pooled over all rows and
    all slots so they equal per-channel stats over every output position.
    """
    acc = jnp.dot(x_ref[...], w_ref[...], preferred_element_type=jnp.float32)
    acc = acc + b_ref[...]
    M, N = acc.shape
    C = N // groups
    inv_n = 1.0 / float(M * groups)

    colsum = jnp.sum(acc, axis=0, keepdims=True)                      # (1, N)
    csum = colsum[:, 0:C]
    for g in range(1, groups):
        csum = csum + colsum[:, g * C:(g + 1) * C]
    mean = csum * inv_n                                               # (1, C)
    mean_full = mean if groups == 1 else jnp.concatenate([mean] * groups, axis=1)

    xc = acc - mean_full
    sqsum = jnp.sum(xc * xc, axis=0, keepdims=True)                   # (1, N)
    ssum = sqsum[:, 0:C]
    for g in range(1, groups):
        ssum = ssum + sqsum[:, g * C:(g + 1) * C]
    var = ssum * inv_n                                                # (1, C)

    scale = g_ref[...] * lax.rsqrt(var + eps)                         # (1, C)
    scale_full = scale if groups == 1 else jnp.concatenate([scale] * groups, axis=1)
    beta_full = bt_ref[...] if groups == 1 else jnp.concatenate([bt_ref[...]] * groups, axis=1)

    o_ref[...] = jnp.maximum(xc * scale_full + beta_full, 0.0)


def _bmm_aat_kernel(l_ref, o_ref):
    l = l_ref[...]
    o_ref[...] = jnp.einsum("bik,bjk->bij", l, l, preferred_element_type=jnp.float32)


def _z_project_kernel(var_ref, mean_ref, eps_ref, w_ref, b_ref, o_ref):
    """z = mean + tril(projected_var) @ eps, then project: z @ W + b."""
    B, Z, _ = var_ref.shape
    row = lax.broadcasted_iota(jnp.int32, (Z, Z), 0)
    col = lax.broadcasted_iota(jnp.int32, (Z, Z), 1)
    tril = jnp.where((row >= col)[None, :, :], var_ref[...], 0.0)     # (B, Z, Z)
    z = mean_ref[...] + jnp.sum(tril * eps_ref[...][None, :, :], axis=2)  # (B, Z)
    o_ref[...] = jnp.dot(z, w_ref[...], preferred_element_type=jnp.float32) + b_ref[...]


# ----------------------------------------------------------------------------
# Pallas wrappers (single whole-array VMEM block; shapes here are tiny)
# ----------------------------------------------------------------------------
def gemm_act(x, w, b, activation="none"):
    M, N = x.shape[0], w.shape[1]
    return pl.pallas_call(
        functools.partial(_gemm_act_kernel, activation=activation),
        out_shape=jax.ShapeDtypeStruct((M, N), jnp.float32),
        in_specs=_vmem_specs(3),
        out_specs=pl.BlockSpec(memory_space=pltpu.MemorySpace.VMEM),
    )(x.astype(jnp.float32), w, b)


def gemm_bn_relu(x, w, b, gamma, beta, groups=1, eps=1e-5):
    M, N = x.shape[0], w.shape[1]
    # TODO(synk): single-block design (BN batch stats need all of M resident);
    # switch to a two-pass tiled variant if M*N ever grows to MiB scale.
    return pl.pallas_call(
        functools.partial(_gemm_bn_relu_kernel, groups=groups, eps=eps),
        out_shape=jax.ShapeDtypeStruct((M, N), jnp.float32),
        in_specs=_vmem_specs(5),
        out_specs=pl.BlockSpec(memory_space=pltpu.MemorySpace.VMEM),
    )(x.astype(jnp.float32), w, b, gamma, beta)


def bmm_aat(L):
    """cov[b] = L[b] @ L[b]^T for a (B, Z, Z) stack (block-diagonal L)."""
    B, Z, _ = L.shape
    return pl.pallas_call(
        _bmm_aat_kernel,
        out_shape=jax.ShapeDtypeStruct((B, Z, Z), jnp.float32),
        in_specs=_vmem_specs(1),
        out_specs=pl.BlockSpec(memory_space=pltpu.MemorySpace.VMEM),
    )(L.astype(jnp.float32))


def z_project(projected_var, mean, eps_vec, proj_w, proj_b):
    B, Z = mean.shape
    N = proj_w.shape[1]
    return pl.pallas_call(
        _z_project_kernel,
        out_shape=jax.ShapeDtypeStruct((B, N), jnp.float32),
        in_specs=_vmem_specs(5),
        out_specs=pl.BlockSpec(memory_space=pltpu.MemorySpace.VMEM),
    )(projected_var.astype(jnp.float32), mean,
      eps_vec.reshape(1, Z).astype(jnp.float32), proj_w, proj_b)


# ----------------------------------------------------------------------------
# Conv / deconv: im2col glue + fused Pallas GEMM
# ----------------------------------------------------------------------------
def conv3x3_s2(x_nhwc, wmat, bias, cout, gamma=None, beta=None):
    """Conv2d(k=3, stride=2, padding=1) (+ optional fused BN+ReLU)."""
    B, H, W, Cin = x_nhwc.shape
    Ho, Wo = (H + 1) // 2, (W + 1) // 2
    xp = jnp.pad(x_nhwc, ((0, 0), (1, 1), (1, 1), (0, 0)))
    patches = [xp[:, kh::2, kw::2, :][:, :Ho, :Wo, :]
               for kh in range(3) for kw in range(3)]
    pat = jnp.stack(patches, axis=3).reshape(B * Ho * Wo, 9 * Cin)
    # TODO(synk): patch matrix is still materialized in HBM; at these shapes it
    # is <100 KiB so in-kernel gather is not worth the lowering risk.
    if gamma is None:
        y = gemm_act(pat, wmat, bias)
    else:
        y = gemm_bn_relu(pat, wmat, bias, gamma, beta, groups=1)
    return y.reshape(B, Ho, Wo, wmat.shape[1])[..., :cout]


def deconv4x4_s2(x_nhwc, wmat, bias, cout, gamma=None, beta=None, activation="none"):
    """ConvTranspose2d(k=4, stride=2, padding=1) via 4-phase pixel shuffle."""
    B, H, W, Cin = x_nhwc.shape
    cs = wmat.shape[1] // 4
    xp = jnp.pad(x_nhwc, ((0, 0), (1, 1), (1, 1), (0, 0)))
    patches = [xp[:, r:r + H, c:c + W, :] for r in range(3) for c in range(3)]
    pat = jnp.stack(patches, axis=3).reshape(B * H * W, 9 * Cin)
    if gamma is None:
        y = gemm_act(pat, wmat, bias, activation=activation)
    else:
        y = gemm_bn_relu(pat, wmat, bias, gamma, beta, groups=4)
    y = y.reshape(B, H, W, 2, 2, cs)                       # (b, m, a, n, p, c)
    y = jnp.transpose(y, (0, 1, 3, 2, 4, 5)).reshape(B, 2 * H, 2 * W, cs)
    return y[..., :cout]


# ----------------------------------------------------------------------------
# Weight preparation (done once at init, outside jit)
# ----------------------------------------------------------------------------
def _pad_cols(a, n):
    return jnp.pad(a, ((0, 0), (0, n - a.shape[1])))


def _pad_vec(v, n):
    return jnp.pad(v, (0, n - v.shape[0])).reshape(1, n)


def _conv_gemm_weights(w_oihw, bias):
    cout, cin = w_oihw.shape[:2]
    n = _round_up_lanes(cout)
    wmat = jnp.transpose(w_oihw, (2, 3, 1, 0)).reshape(9 * cin, cout)
    return _pad_cols(wmat, n), _pad_vec(bias, n)


def _deconv_gemm_weights(w_iohw, bias):
    """ConvTranspose2d(k=4,s=2,p=1) -> one GEMM over 3x3 windows of the padded
    input; output slot p = 2*a + b holds channels of output parity (2m+a, 2n+b)."""
    cin, cout = w_iohw.shape[:2]
    assert cout <= _CSLOT
    w = np.asarray(w_iohw, np.float32)
    wm = np.zeros((3, 3, cin, 4, _CSLOT), np.float32)
    kmap = {0: {0: 3, 1: 1}, 1: {1: 2, 2: 0}}   # parity -> {window offset: kernel tap}
    for a in (0, 1):
        for b in (0, 1):
            p = 2 * a + b
            for r, kh in kmap[a].items():
                for c, kw in kmap[b].items():
                    wm[r, c, :, p, :cout] = w[:, :, kh, kw]
    bvec = np.zeros((1, 4 * _CSLOT), np.float32)
    for p in range(4):
        bvec[0, p * _CSLOT:p * _CSLOT + cout] = np.asarray(bias, np.float32)
    return jnp.asarray(wm.reshape(9 * cin, 4 * _CSLOT)), jnp.asarray(bvec)


def init_params(key, image_size, channel_num, kernel_num, z_size):
    blocks = 10
    d = z_size // blocks
    m = d * (d - 1) // 2
    fs = image_size // 8
    fv = kernel_num * fs * fs
    k4, k2 = kernel_num // 4, kernel_num // 2
    ks = iter(jax.random.split(key, 32))

    def conv_w(cout, cin):
        return jax.random.normal(next(ks), (cout, cin, 3, 3), jnp.float32) / np.sqrt(cin * 9)

    def deconv_w(cin, cout):
        return jax.random.normal(next(ks), (cin, cout, 4, 4), jnp.float32) / np.sqrt(cin * 16)

    def lin_w(cin, cout):
        return jax.random.normal(next(ks), (cin, cout), jnp.float32) / np.sqrt(cin)

    def vec(n, scale=0.01):
        return scale * jax.random.normal(next(ks), (n,), jnp.float32)

    p = {}
    p["enc1_w"], p["enc1_b"] = _conv_gemm_weights(conv_w(k4, channel_num), vec(k4))
    p["enc1_g"] = _pad_vec(jnp.ones((k4,), jnp.float32), p["enc1_w"].shape[1])
    p["enc1_beta"] = _pad_vec(jnp.zeros((k4,), jnp.float32), p["enc1_w"].shape[1])
    p["enc2_w"], p["enc2_b"] = _conv_gemm_weights(conv_w(k2, k4), vec(k2))
    p["enc2_g"] = _pad_vec(jnp.ones((k2,), jnp.float32), p["enc2_w"].shape[1])
    p["enc2_beta"] = _pad_vec(jnp.zeros((k2,), jnp.float32), p["enc2_w"].shape[1])
    p["enc3_w"], p["enc3_b"] = _conv_gemm_weights(conv_w(kernel_num, k2), vec(kernel_num))

    # q_mean / q_logvar / q_logvar_corr fused into one lane-padded GEMM
    qw = jnp.concatenate([lin_w(fv, z_size), lin_w(fv, blocks * d), lin_w(fv, blocks * m)], axis=1)
    qb = jnp.concatenate([vec(z_size), vec(blocks * d), vec(blocks * m)], axis=0)
    qn = _round_up_lanes(qw.shape[1])
    p["q_w"], p["q_b"] = _pad_cols(qw, qn), _pad_vec(qb, qn)

    pn = _round_up_lanes(fv)
    p["proj_w"], p["proj_b"] = _pad_cols(lin_w(z_size, fv), pn), _pad_vec(vec(fv), pn)

    p["dec1_w"], p["dec1_b"] = _deconv_gemm_weights(deconv_w(kernel_num, k2), vec(k2))
    p["dec1_g"] = _pad_vec(jnp.ones((k2,), jnp.float32), _CSLOT)
    p["dec1_beta"] = _pad_vec(jnp.zeros((k2,), jnp.float32), _CSLOT)
    p["dec2_w"], p["dec2_b"] = _deconv_gemm_weights(deconv_w(k2, k4), vec(k4))
    p["dec2_g"] = _pad_vec(jnp.ones((k4,), jnp.float32), _CSLOT)
    p["dec2_beta"] = _pad_vec(jnp.zeros((k4,), jnp.float32), _CSLOT)
    p["dec3_w"], p["dec3_b"] = _deconv_gemm_weights(deconv_w(k4, channel_num), vec(channel_num))

    cfg = dict(image_size=image_size, channel_num=channel_num, kernel_num=kernel_num,
               z_size=z_size, blocks=blocks, cov_space=d, corr_size=m,
               feature_size=fs, feature_volume=fv)
    return p, cfg


# ----------------------------------------------------------------------------
# Forward pass
# ----------------------------------------------------------------------------
def vae_forward(params, x_nchw, Pr, eps_vec, *, cfg):
    del Pr  # unused by the reference forward (shadowed inside RPproject)
    blocks, d, m = cfg["blocks"], cfg["cov_space"], cfg["corr_size"]
    z_size, kn = cfg["z_size"], cfg["kernel_num"]
    fs, fv, cn = cfg["feature_size"], cfg["feature_volume"], cfg["channel_num"]
    k4, k2 = kn // 4, kn // 2
    B = x_nchw.shape[0]
    assert B <= blocks  # RPproject masked_scatter reproduction assumes batch <= blocks

    x = jnp.transpose(x_nchw, (0, 2, 3, 1))                           # NCHW -> NHWC

    # ---- encoder: conv + bias + BN + ReLU fused in one GEMM per layer --------
    h = conv3x3_s2(x, params["enc1_w"], params["enc1_b"], k4,
                   gamma=params["enc1_g"], beta=params["enc1_beta"])
    h = conv3x3_s2(h, params["enc2_w"], params["enc2_b"], k2,
                   gamma=params["enc2_g"], beta=params["enc2_beta"])
    enc = conv3x3_s2(h, params["enc3_w"], params["enc3_b"], kn)       # (B, fs, fs, kn)

    # ---- q_mean / q_logvar / q_logvar_corr: one fused GEMM -------------------
    unrolled = jnp.transpose(enc, (0, 3, 1, 2)).reshape(B, -1)        # PyTorch NCHW flatten
    q = gemm_act(unrolled, params["q_w"], params["q_b"])
    mean = q[:, :z_size]
    logvar = q[:, z_size:2 * z_size]
    logcorr = q[:, 2 * z_size:2 * z_size + blocks * m]

    # ---- lower_tri_cov per block, assembled block-diagonally -----------------
    std = jnp.exp(0.5 * logvar).reshape(B, blocks, d)
    rho = jnp.zeros((B, blocks, d, d), jnp.float32)
    if m > 0:
        tr, tc = np.tril_indices(d, -1)                               # == torch.tril_indices
        rho = rho.at[:, :, tr, tc].set(logcorr.reshape(B, blocks, m))
    Lb = (std[..., :, None] * std[..., None, :]) * rho \
        + std[..., :, None] * jnp.eye(d, dtype=jnp.float32) + 1e-6    # +1e-6 on every block entry

    rr = (np.arange(blocks) * d)[:, None, None] + np.arange(d)[None, :, None]
    cc = (np.arange(blocks) * d)[:, None, None] + np.arange(d)[None, None, :]
    L_bd = jnp.zeros((B, z_size, z_size), jnp.float32).at[:, rr, cc].set(Lb)

    cov_bd = bmm_aat(L_bd)                                            # Pallas: batched L @ L^T
    cov_blocks = cov_bd[:, rr, cc]                                    # (B, blocks, d, d)
    b_ltr = [cov_blocks[:, k] for k in range(blocks)]

    # ---- RPproject: reproduces masked_scatter_ semantics exactly --------------
    # Only the first min(B, blocks) diagonal blocks are masked, and the stacked
    # source is consumed in flat order: projected_var[i, block k] = cov block i
    # of batch element k.
    nfill = min(B, blocks)
    swapped = jnp.swapaxes(cov_blocks, 0, 1)                          # (blocks, B, d, d)
    pv_blocks = jnp.zeros((B, blocks, d, d), jnp.float32).at[:, :nfill].set(
        swapped[:B, :nfill])
    projected_var = jnp.zeros((B, z_size, z_size), jnp.float32).at[:, rr, cc].set(pv_blocks)

    # ---- z = mean + tril(projected_var) @ eps, fused with project Linear -----
    zp = z_project(projected_var, mean, eps_vec, params["proj_w"], params["proj_b"])[:, :fv]
    zp = jnp.transpose(zp.reshape(B, kn, fs, fs), (0, 2, 3, 1))       # NCHW view -> NHWC

    # ---- decoder: deconv + bias + BN + ReLU / sigmoid fused per layer --------
    h = deconv4x4_s2(zp, params["dec1_w"], params["dec1_b"], k2,
                     gamma=params["dec1_g"], beta=params["dec1_beta"])
    h = deconv4x4_s2(h, params["dec2_w"], params["dec2_b"], k4,
                     gamma=params["dec2_g"], beta=params["dec2_beta"])
    xr = deconv4x4_s2(h, params["dec3_w"], params["dec3_b"], cn, activation="sigmoid")
    x_reconstructed = jnp.transpose(xr, (0, 3, 1, 2))                 # back to NCHW

    return (mean, b_ltr, projected_var), x_reconstructed


# ----------------------------------------------------------------------------
if __name__ == "__main__":
    key = jax.random.PRNGKey(0)
    image_size, channel_num, kernel_num, z_size = 16, 4, 16, 20
    batch = 2

    kp, kx, ke = jax.random.split(key, 3)
    params, cfg = init_params(kp, image_size, channel_num, kernel_num, z_size)

    x = jax.random.normal(kx, (batch, channel_num, image_size, image_size), jnp.float32)
    Pr = jnp.zeros((z_size, z_size), jnp.float32)        # unused by the forward
    eps = jax.random.normal(ke, (z_size,), jnp.float32)  # replaces torch.randn in z_RP

    fwd = jax.jit(functools.partial(vae_forward, cfg=cfg))
    (mean, b_ltr, projected_var), x_rec = fwd(params, x, Pr, eps)

    jax.block_until_ready(x_rec)
    jax.block_until_ready(mean)
    jax.block_until_ready(projected_var)
    assert x_rec.shape == (batch, channel_num, image_size, image_size)
    assert mean.shape == (batch, z_size)
    assert len(b_ltr) == cfg["blocks"]
    assert b_ltr[0].shape == (batch, cfg["cov_space"], cfg["cov_space"])
    print("KERNEL_OK")
</pallas_src>

<mosaic_0001>
module attributes {stable_mosaic.version = 11 : i64} {
  func.func @_gemm_bn_relu_kernel(%arg0: memref<128x36xf32, #tpu.memory_space<vmem>>, %arg1: memref<36x128xf32, #tpu.memory_space<vmem>>, %arg2: memref<1x128xf32, #tpu.memory_space<vmem>>, %arg3: memref<1x128xf32, #tpu.memory_space<vmem>>, %arg4: memref<1x128xf32, #tpu.memory_space<vmem>>, %arg5: memref<128x128xf32, #tpu.memory_space<vmem>>) attributes {dimension_semantics = [], scalar_prefetch = 0 : i64, scratch_operands = 0 : i64, tpu.core_type = #tpu.core_type<tc>} {
    %c0 = arith.constant 0 : index
    %c0_0 = arith.constant 0 : index
    %0 = vector.load %arg0[%c0, %c0_0] : memref<128x36xf32, #tpu.memory_space<vmem>>, vector<128x36xf32>
    %c0_1 = arith.constant 0 : index
    %c0_2 = arith.constant 0 : index
    %1 = vector.load %arg1[%c0_1, %c0_2] : memref<36x128xf32, #tpu.memory_space<vmem>>, vector<36x128xf32>
    %cst = arith.constant dense<0.000000e+00> : vector<128x128xf32>
    %2 = tpu.matmul %0, %1, %cst {dimension_numbers = #tpu.dot_dimension_numbers<[1], [0], [0], [1], [0, 0, 1, 1], [], []>} : vector<128x36xf32>, vector<36x128xf32>, vector<128x128xf32> -> vector<128x128xf32>
    %c0_3 = arith.constant 0 : index
    %c0_4 = arith.constant 0 : index
    %3 = vector.load %arg2[%c0_3, %c0_4] : memref<1x128xf32, #tpu.memory_space<vmem>>, vector<1x128xf32>
    %4 = vector.broadcast %3 : vector<1x128xf32> to vector<128x128xf32>
    %5 = arith.addf %2, %4 : vector<128x128xf32>
    %cst_5 = arith.constant dense<0.000000e+00> : vector<128xf32>
    %6 = vector.multi_reduction <add>, %5, %cst_5 [0] : vector<128x128xf32> to vector<128xf32>
    %7 = vector.shape_cast %6 : vector<128xf32> to vector<1x128xf32>
    %cst_6 = arith.constant 7.812500e-03 : f32
    %8 = vector.broadcast %cst_6 : f32 to vector<1x128xf32>
    %9 = arith.mulf %7, %8 : vector<1x128xf32>
    %10 = vector.broadcast %9 : vector<1x128xf32> to vector<128x128xf32>
    %11 = arith.subf %5, %10 : vector<128x128xf32>
    %12 = arith.mulf %11, %11 : vector<128x128xf32>
    %cst_7 = arith.constant dense<0.000000e+00> : vector<128xf32>
    %13 = vector.multi_reduction <add>, %12, %cst_7 [0] : vector<128x128xf32> to vector<128xf32>
    %14 = vector.shape_cast %13 : vector<128xf32> to vector<1x128xf32>
    %cst_8 = arith.constant 7.812500e-03 : f32
    %15 = vector.broadcast %cst_8 : f32 to vector<1x128xf32>
    %16 = arith.mulf %14, %15 : vector<1x128xf32>
    %c0_9 = arith.constant 0 : index
    %c0_10 = arith.constant 0 : index
    %17 = vector.load %arg3[%c0_9, %c0_10] : memref<1x128xf32, #tpu.memory_space<vmem>>, vector<1x128xf32>
    %cst_11 = arith.constant 9.99999974E-6 : f32
    %18 = vector.broadcast %cst_11 : f32 to vector<1x128xf32>
    %19 = arith.addf %16, %18 : vector<1x128xf32>
    %20 = math.rsqrt %19 : vector<1x128xf32>
    %21 = arith.mulf %17, %20 : vector<1x128xf32>
    %c0_12 = arith.constant 0 : index
    %c0_13 = arith.constant 0 : index
    %22 = vector.load %arg4[%c0_12, %c0_13] : memref<1x128xf32, #tpu.memory_space<vmem>>, vector<1x128xf32>
    %23 = vector.broadcast %21 : vector<1x128xf32> to vector<128x128xf32>
    %24 = arith.mulf %11, %23 : vector<128x128xf32>
    %25 = vector.broadcast %22 : vector<1x128xf32> to vector<128x128xf32>
    %26 = arith.addf %24, %25 : vector<128x128xf32>
    %cst_14 = arith.constant 0.000000e+00 : f32
    %27 = vector.broadcast %cst_14 : f32 to vector<128x128xf32>
    %28 = arith.maximumf %26, %27 : vector<128x128xf32>
    %c0_15 = arith.constant 0 : index
    %c0_16 = arith.constant 0 : index
    %29 = vector.load %arg5[%c0_15, %c0_16] : memref<128x128xf32, #tpu.memory_space<vmem>>, vector<128x128xf32>
    tpu.vector_store %arg5[%c0_15, %c0_16], %28 {strides = array<i32>} : memref<128x128xf32, #tpu.memory_space<vmem>>, vector<128x128xf32>,
    return
  }
}

module attributes {stable_mosaic.version = 11 : i64} {
  func.func @_gemm_bn_relu_kernel(%arg0: memref<32x36xf32, #tpu.memory_space<vmem>>, %arg1: memref<36x128xf32, #tpu.memory_space<vmem>>, %arg2: memref<1x128xf32, #tpu.memory_space<vmem>>, %arg3: memref<1x128xf32, #tpu.memory_space<vmem>>, %arg4: memref<1x128xf32, #tpu.memory_space<vmem>>, %arg5: memref<32x128xf32, #tpu.memory_space<vmem>>) attributes {dimension_semantics = [], scalar_prefetch = 0 : i64, scratch_operands = 0 : i64, tpu.core_type = #tpu.core_type<tc>} {
    %c0 = arith.constant 0 : index
    %c0_0 = arith.constant 0 : index
    %0 = vector.load %arg0[%c0, %c0_0] : memref<32x36xf32, #tpu.memory_space<vmem>>, vector<32x36xf32>
    %c0_1 = arith.constant 0 : index
    %c0_2 = arith.constant 0 : index
    %1 = vector.load %arg1[%c0_1, %c0_2] : memref<36x128xf32, #tpu.memory_space<vmem>>, vector<36x128xf32>
    %cst = arith.constant dense<0.000000e+00> : vector<32x128xf32>
    %2 = tpu.matmul %0, %1, %cst {dimension_numbers = #tpu.dot_dimension_numbers<[1], [0], [0], [1], [0, 0, 1, 1], [], []>} : vector<32x36xf32>, vector<36x128xf32>, vector<32x128xf32> -> vector<32x128xf32>
    %c0_3 = arith.constant 0 : index
    %c0_4 = arith.constant 0 : index
    %3 = vector.load %arg2[%c0_3, %c0_4] : memref<1x128xf32, #tpu.memory_space<vmem>>, vector<1x128xf32>
    %4 = vector.broadcast %3 : vector<1x128xf32> to vector<32x128xf32>
    %5 = arith.addf %2, %4 : vector<32x128xf32>
    %cst_5 = arith.constant dense<0.000000e+00> : vector<128xf32>
    %6 = vector.multi_reduction <add>, %5, %cst_5 [0] : vector<32x128xf32> to vector<128xf32>
    %7 = vector.shape_cast %6 : vector<128xf32> to vector<1x128xf32>
    %cst_6 = arith.constant 3.125000e-02 : f32
    %8 = vector.broadcast %cst_6 : f32 to vector<1x128xf32>
    %9 = arith.mulf %7, %8 : vector<1x128xf32>
    %10 = vector.broadcast %9 : vector<1x128xf32> to vector<32x128xf32>
    %11 = arith.subf %5, %10 : vector<32x128xf32>
    %12 = arith.mulf %11, %11 : vector<32x128xf32>
    %cst_7 = arith.constant dense<0.000000e+00> : vector<128xf32>
    %13 = vector.multi_reduction <add>, %12, %cst_7 [0] : vector<32x128xf32> to vector<128xf32>
    %14 = vector.shape_cast %13 : vector<128xf32> to vector<1x128xf32>
    %cst_8 = arith.constant 3.125000e-02 : f32
    %15 = vector.broadcast %cst_8 : f32 to vector<1x128xf32>
    %16 = arith.mulf %14, %15 : vector<1x128xf32>
    %c0_9 = arith.constant 0 : index
    %c0_10 = arith.constant 0 : index
    %17 = vector.load %arg3[%c0_9, %c0_10] : memref<1x128xf32, #tpu.memory_space<vmem>>, vector<1x128xf32>
    %cst_11 = arith.constant 9.99999974E-6 : f32
    %18 = vector.broadcast %cst_11 : f32 to vector<1x128xf32>
    %19 = arith.addf %16, %18 : vector<1x128xf32>
    %20 = math.rsqrt %19 : vector<1x128xf32>
    %21 = arith.mulf %17, %20 : vector<1x128xf32>
    %c0_12 = arith.constant 0 : index
    %c0_13 = arith.constant 0 : index
    %22 = vector.load %arg4[%c0_12, %c0_13] : memref<1x128xf32, #tpu.memory_space<vmem>>, vector<1x128xf32>
    %23 = vector.broadcast %21 : vector<1x128xf32> to vector<32x128xf32>
    %24 = arith.mulf %11, %23 : vector<32x128xf32>
    %25 = vector.broadcast %22 : vector<1x128xf32> to vector<32x128xf32>
    %26 = arith.addf %24, %25 : vector<32x128xf32>
    %cst_14 = arith.constant 0.000000e+00 : f32
    %27 = vector.broadcast %cst_14 : f32 to vector<32x128xf32>
    %28 = arith.maximumf %26, %27 : vector<32x128xf32>
    %c0_15 = arith.constant 0 : index
    %c0_16 = arith.constant 0 : index
    %29 = vector.load %arg5[%c0_15, %c0_16] : memref<32x128xf32, #tpu.memory_space<vmem>>, vector<32x128xf32>
    tpu.vector_store %arg5[%c0_15, %c0_16], %28 {strides = array<i32>} : memref<32x128xf32, #tpu.memory_space<vmem>>, vector<32x128xf32>,
    return
  }
}

module attributes {stable_mosaic.version = 11 : i64} {
  func.func @_gemm_act_kernel(%arg0: memref<8x72xf32, #tpu.memory_space<vmem>>, %arg1: memref<72x128xf32, #tpu.memory_space<vmem>>, %arg2: memref<1x128xf32, #tpu.memory_space<vmem>>, %arg3: memref<8x128xf32, #tpu.memory_space<vmem>>) attributes {dimension_semantics = [], scalar_prefetch = 0 : i64, scratch_operands = 0 : i64, tpu.core_type = #tpu.core_type<tc>} {
    %c0 = arith.constant 0 : index
    %c0_0 = arith.constant 0 : index
    %0 = vector.load %arg0[%c0, %c0_0] : memref<8x72xf32, #tpu.memory_space<vmem>>, vector<8x72xf32>
    %c0_1 = arith.constant 0 : index
    %c0_2 = arith.constant 0 : index
    %1 = vector.load %arg1[%c0_1, %c0_2] : memref<72x128xf32, #tpu.memory_space<vmem>>, vector<72x128xf32>
    %cst = arith.constant dense<0.000000e+00> : vector<8x128xf32>
    %2 = tpu.matmul %0, %1, %cst {dimension_numbers = #tpu.dot_dimension_numbers<[1], [0], [0], [1], [0, 0, 1, 1], [], []>} : vector<8x72xf32>, vector<72x128xf32>, vector<8x128xf32> -> vector<8x128xf32>
    %c0_3 = arith.constant 0 : index
    %c0_4 = arith.constant 0 : index
    %3 = vector.load %arg2[%c0_3, %c0_4] : memref<1x128xf32, #tpu.memory_space<vmem>>, vector<1x128xf32>
    %4 = vector.broadcast %3 : vector<1x128xf32> to vector<8x128xf32>
    %5 = arith.addf %2, %4 : vector<8x128xf32>
    %c0_5 = arith.constant 0 : index
    %c0_6 = arith.constant 0 : index
    %6 = vector.load %arg3[%c0_5, %c0_6] : memref<8x128xf32, #tpu.memory_space<vmem>>, vector<8x128xf32>
    tpu.vector_store %arg3[%c0_5, %c0_6], %5 {strides = array<i32>} : memref<8x128xf32, #tpu.memory_space<vmem>>, vector<8x128xf32>,
    return
  }
}

module attributes {stable_mosaic.version = 11 : i64} {
  func.func @_gemm_act_kernel(%arg0: memref<2x64xf32, #tpu.memory_space<vmem>>, %arg1: memref<64x128xf32, #tpu.memory_space<vmem>>, %arg2: memref<1x128xf32, #tpu.memory_space<vmem>>, %arg3: memref<2x128xf32, #tpu.memory_space<vmem>>) attributes {dimension_semantics = [], scalar_prefetch = 0 : i64, scratch_operands = 0 : i64, tpu.core_type = #tpu.core_type<tc>} {
    %c0 = arith.constant 0 : index
    %c0_0 = arith.constant 0 : index
    %0 = vector.load %arg0[%c0, %c0_0] : memref<2x64xf32, #tpu.memory_space<vmem>>, vector<2x64xf32>
    %c0_1 = arith.constant 0 : index
    %c0_2 = arith.constant 0 : index
    %1 = vector.load %arg1[%c0_1, %c0_2] : memref<64x128xf32, #tpu.memory_space<vmem>>, vector<64x128xf32>
    %cst = arith.constant dense<0.000000e+00> : vector<2x128xf32>
    %2 = tpu.matmul %0, %1, %cst {dimension_numbers = #tpu.dot_dimension_numbers<[1], [0], [0], [1], [0, 0, 1, 1], [], []>} : vector<2x64xf32>, vector<64x128xf32>, vector<2x128xf32> -> vector<2x128xf32>
    %c0_3 = arith.constant 0 : index
    %c0_4 = arith.constant 0 : index
    %3 = vector.load %arg2[%c0_3, %c0_4] : memref<1x128xf32, #tpu.memory_space<vmem>>, vector<1x128xf32>
    %4 = vector.broadcast %3 : vector<1x128xf32> to vector<2x128xf32>
    %5 = arith.addf %2, %4 : vector<2x128xf32>
    %c0_5 = arith.constant 0 : index
    %c0_6 = arith.constant 0 : index
    %6 = vector.load %arg3[%c0_5, %c0_6] : memref<2x128xf32, #tpu.memory_space<vmem>>, vector<2x128xf32>
    tpu.vector_store %arg3[%c0_5, %c0_6], %5 {strides = array<i32>} : memref<2x128xf32, #tpu.memory_space<vmem>>, vector<2x128xf32>,
    return
  }
}

module attributes {stable_mosaic.version = 11 : i64} {
  func.func @_bmm_aat_kernel(%arg0: memref<2x20x20xf32, #tpu.memory_space<vmem>>, %arg1: memref<2x20x20xf32, #tpu.memory_space<vmem>>) attributes {dimension_semantics = [], scalar_prefetch = 0 : i64, scratch_operands = 0 : i64, tpu.core_type = #tpu.core_type<tc>} {
    %c0 = arith.constant 0 : index
    %c0_0 = arith.constant 0 : index
    %c0_1 = arith.constant 0 : index
    %0 = vector.load %arg0[%c0, %c0_0, %c0_1] : memref<2x20x20xf32, #tpu.memory_space<vmem>>, vector<2x20x20xf32>
    "tpu.trace_start"() <{level = 10 : i32, message = "bik,bjk->bij"}> : () -> ()
    %cst = arith.constant dense<0.000000e+00> : vector<2x20x20xf32>
    %1 = tpu.matmul %0, %0, %cst {dimension_numbers = #tpu.dot_dimension_numbers<[2], [2], [1], [1], [0, 0, 0, 1, 1, 1], [0], [0]>} : vector<2x20x20xf32>, vector<2x20x20xf32>, vector<2x20x20xf32> -> vector<2x20x20xf32>
    "tpu.trace_stop"() : () -> ()
    %c0_2 = arith.constant 0 : index
    %c0_3 = arith.constant 0 : index
    %c0_4 = arith.constant 0 : index
    %2 = vector.load %arg1[%c0_2, %c0_3, %c0_4] : memref<2x20x20xf32, #tpu.memory_space<vmem>>, vector<2x20x20xf32>
    tpu.vector_store %arg1[%c0_2, %c0_3, %c0_4], %1 {strides = array<i32>} : memref<2x20x20xf32, #tpu.memory_space<vmem>>, vector<2x20x20xf32>,
    return
  }
}

module attributes {stable_mosaic.version = 11 : i64} {
  func.func @_z_project_kernel(%arg0: memref<2x20x20xf32, #tpu.memory_space<vmem>>, %arg1: memref<2x20xf32, #tpu.memory_space<vmem>>, %arg2: memref<1x20xf32, #tpu.memory_space<vmem>>, %arg3: memref<20x128xf32, #tpu.memory_space<vmem>>, %arg4: memref<1x128xf32, #tpu.memory_space<vmem>>, %arg5: memref<2x128xf32, #tpu.memory_space<vmem>>) attributes {dimension_semantics = [], scalar_prefetch = 0 : i64, scratch_operands = 0 : i64, tpu.core_type = #tpu.core_type<tc>} {
    %0 = tpu.iota {dimensions = array<i32: 0>} : vector<20x20xi32>
    %1 = tpu.iota {dimensions = array<i32: 1>} : vector<20x20xi32>
    %2 = arith.cmpi sge, %0, %1 : vector<20x20xi32>
    %3 = vector.shape_cast %2 : vector<20x20xi1> to vector<1x20x20xi1>
    %c0 = arith.constant 0 : index
    %c0_0 = arith.constant 0 : index
    %c0_1 = arith.constant 0 : index
    %4 = vector.load %arg0[%c0, %c0_0, %c0_1] : memref<2x20x20xf32, #tpu.memory_space<vmem>>, vector<2x20x20xf32>
    %cst = arith.constant 0.000000e+00 : f32
    %5 = vector.shape_cast %3 : vector<1x20x20xi1> to vector<1x20x20xi1>
    %6 = vector.broadcast %5 : vector<1x20x20xi1> to vector<2x20x20xi1>
    %7 = vector.broadcast %cst : f32 to vector<2x20x20xf32>
    %8 = arith.select %6, %4, %7 : vector<2x20x20xi1>, vector<2x20x20xf32>
    %c0_2 = arith.constant 0 : index
    %c0_3 = arith.constant 0 : index
    %9 = vector.load %arg1[%c0_2, %c0_3] : memref<2x20xf32, #tpu.memory_space<vmem>>, vector<2x20xf32>
    %c0_4 = arith.constant 0 : index
    %c0_5 = arith.constant 0 : index
    %10 = vector.load %arg2[%c0_4, %c0_5] : memref<1x20xf32, #tpu.memory_space<vmem>>, vector<1x20xf32>
    %11 = vector.shape_cast %10 : vector<1x20xf32> to vector<1x1x20xf32>
    %12 = vector.broadcast %11 : vector<1x1x20xf32> to vector<2x20x20xf32>
    %13 = arith.mulf %8, %12 : vector<2x20x20xf32>
    %cst_6 = arith.constant dense<0.000000e+00> : vector<2x20xf32>
    %14 = vector.multi_reduction <add>, %13, %cst_6 [2] : vector<2x20x20xf32> to vector<2x20xf32>
    %15 = arith.addf %9, %14 : vector<2x20xf32>
    %c0_7 = arith.constant 0 : index
    %c0_8 = arith.constant 0 : index
    %16 = vector.load %arg3[%c0_7, %c0_8] : memref<20x128xf32, #tpu.memory_space<vmem>>, vector<20x128xf32>
    %cst_9 = arith.constant dense<0.000000e+00> : vector<2x128xf32>
    %17 = tpu.matmul %15, %16, %cst_9 {dimension_numbers = #tpu.dot_dimension_numbers<[1], [0], [0], [1], [0, 0, 1, 1], [], []>} : vector<2x20xf32>, vector<20x128xf32>, vector<2x128xf32> -> vector<2x128xf32>
    %c0_10 = arith.constant 0 : index
    %c0_11 = arith.constant 0 : index
    %18 = vector.load %arg4[%c0_10, %c0_11] : memref<1x128xf32, #tpu.memory_space<vmem>>, vector<1x128xf32>
    %19 = vector.broadcast %18 : vector<1x128xf32> to vector<2x128xf32>
    %20 = arith.addf %17, %19 : vector<2x128xf32>
    %c0_12 = arith.constant 0 : index
    %c0_13 = arith.constant 0 : index
    %21 = vector.load %arg5[%c0_12, %c0_13] : memref<2x128xf32, #tpu.memory_space<vmem>>, vector<2x128xf32>
    tpu.vector_store %arg5[%c0_12, %c0_13], %20 {strides = array<i32>} : memref<2x128xf32, #tpu.memory_space<vmem>>, vector<2x128xf32>,
    return
  }
}

module attributes {stable_mosaic.version = 11 : i64} {
  func.func @_gemm_bn_relu_kernel(%arg0: memref<8x144xf32, #tpu.memory_space<vmem>>, %arg1: memref<144x128xf32, #tpu.memory_space<vmem>>, %arg2: memref<1x128xf32, #tpu.memory_space<vmem>>, %arg3: memref<1x32xf32, #tpu.memory_space<vmem>>, %arg4: memref<1x32xf32, #tpu.memory_space<vmem>>, %arg5: memref<8x128xf32, #tpu.memory_space<vmem>>) attributes {dimension_semantics = [], scalar_prefetch = 0 : i64, scratch_operands = 0 : i64, tpu.core_type = #tpu.core_type<tc>} {
    %c0 = arith.constant 0 : index
    %c0_0 = arith.constant 0 : index
    %0 = vector.load %arg0[%c0, %c0_0] : memref<8x144xf32, #tpu.memory_space<vmem>>, vector<8x144xf32>
    %c0_1 = arith.constant 0 : index
    %c0_2 = arith.constant 0 : index
    %1 = vector.load %arg1[%c0_1, %c0_2] : memref<144x128xf32, #tpu.memory_space<vmem>>, vector<144x128xf32>
    %cst = arith.constant dense<0.000000e+00> : vector<8x128xf32>
    %2 = tpu.matmul %0, %1, %cst {dimension_numbers = #tpu.dot_dimension_numbers<[1], [0], [0], [1], [0, 0, 1, 1], [], []>} : vector<8x144xf32>, vector<144x128xf32>, vector<8x128xf32> -> vector<8x128xf32>
    %c0_3 = arith.constant 0 : index
    %c0_4 = arith.constant 0 : index
    %3 = vector.load %arg2[%c0_3, %c0_4] : memref<1x128xf32, #tpu.memory_space<vmem>>, vector<1x128xf32>
    %4 = vector.broadcast %3 : vector<1x128xf32> to vector<8x128xf32>
    %5 = arith.addf %2, %4 : vector<8x128xf32>
    %cst_5 = arith.constant dense<0.000000e+00> : vector<128xf32>
    %6 = vector.multi_reduction <add>, %5, %cst_5 [0] : vector<8x128xf32> to vector<128xf32>
    %7 = vector.shape_cast %6 : vector<128xf32> to vector<1x128xf32>
    %8 = vector.extract_strided_slice %7 {offsets = [0, 0], sizes = [1, 32], strides = [1, 1]} : vector<1x128xf32> to vector<1x32xf32>
    %9 = vector.extract_strided_slice %7 {offsets = [0, 32], sizes = [1, 32], strides = [1, 1]} : vector<1x128xf32> to vector<1x32xf32>
    %10 = arith.addf %8, %9 : vector<1x32xf32>
    %11 = vector.extract_strided_slice %7 {offsets = [0, 64], sizes = [1, 32], strides = [1, 1]} : vector<1x128xf32> to vector<1x32xf32>
    %12 = arith.addf %10, %11 : vector<1x32xf32>
    %13 = vector.extract_strided_slice %7 {offsets = [0, 96], sizes = [1, 32], strides = [1, 1]} : vector<1x128xf32> to vector<1x32xf32>
    %14 = arith.addf %12, %13 : vector<1x32xf32>
    %cst_6 = arith.constant 3.125000e-02 : f32
    %15 = vector.broadcast %cst_6 : f32 to vector<1x32xf32>
    %16 = arith.mulf %14, %15 : vector<1x32xf32>
    %17 = tpu.concatenate %16, %16, %16, %16 in 1 : vector<1x32xf32>, vector<1x32xf32>, vector<1x32xf32>, vector<1x32xf32> -> vector<1x128xf32>
    %18 = vector.broadcast %17 : vector<1x128xf32> to vector<8x128xf32>
    %19 = arith.subf %5, %18 : vector<8x128xf32>
    %20 = arith.mulf %19, %19 : vector<8x128xf32>
    %cst_7 = arith.constant dense<0.000000e+00> : vector<128xf32>
    %21 = vector.multi_reduction <add>, %20, %cst_7 [0] : vector<8x128xf32> to vector<128xf32>
    %22 = vector.shape_cast %21 : vector<128xf32> to vector<1x128xf32>
    %23 = vector.extract_strided_slice %22 {offsets = [0, 0], sizes = [1, 32], strides = [1, 1]} : vector<1x128xf32> to vector<1x32xf32>
    %24 = vector.extract_strided_slice %22 {offsets = [0, 32], sizes = [1, 32], strides = [1, 1]} : vector<1x128xf32> to vector<1x32xf32>
    %25 = arith.addf %23, %24 : vector<1x32xf32>
    %26 = vector.extract_strided_slice %22 {offsets = [0, 64], sizes = [1, 32], strides = [1, 1]} : vector<1x128xf32> to vector<1x32xf32>
    %27 = arith.addf %25, %26 : vector<1x32xf32>
    %28 = vector.extract_strided_slice %22 {offsets = [0, 96], sizes = [1, 32], strides = [1, 1]} : vector<1x128xf32> to vector<1x32xf32>
    %29 = arith.addf %27, %28 : vector<1x32xf32>
    %cst_8 = arith.constant 3.125000e-02 : f32
    %30 = vector.broadcast %cst_8 : f32 to vector<1x32xf32>
    %31 = arith.mulf %29, %30 : vector<1x32xf32>
    %c0_9 = arith.constant 0 : index
    %c0_10 = arith.constant 0 : index
    %32 = vector.load %arg3[%c0_9, %c0_10] : memref<1x32xf32, #tpu.memory_space<vmem>>, vector<1x32xf32>
    %cst_11 = arith.constant 9.99999974E-6 : f32
    %33 = vector.broadcast %cst_11 : f32 to vector<1x32xf32>
    %34 = arith.addf %31, %33 : vector<1x32xf32>
    %35 = math.rsqrt %34 : vector<1x32xf32>
    %36 = arith.mulf %32, %35 : vector<1x32xf32>
    %37 = tpu.concatenate %36, %36, %36, %36 in 1 : vector<1x32xf32>, vector<1x32xf32>, vector<1x32xf32>, vector<1x32xf32> -> vector<1x128xf32>
    %c0_12 = arith.constant 0 : index
    %c0_13 = arith.constant 0 : index
    %38 = vector.load %arg4[%c0_12, %c0_13] : memref<1x32xf32, #tpu.memory_space<vmem>>, vector<1x32xf32>
    %39 = tpu.concatenate %38, %38, %38, %38 in 1 : vector<1x32xf32>, vector<1x32xf32>, vector<1x32xf32>, vector<1x32xf32> -> vector<1x128xf32>
    %40 = vector.broadcast %37 : vector<1x128xf32> to vector<8x128xf32>
    %41 = arith.mulf %19, %40 : vector<8x128xf32>
    %42 = vector.broadcast %39 : vector<1x128xf32> to vector<8x128xf32>
    %43 = arith.addf %41, %42 : vector<8x128xf32>
    %cst_14 = arith.constant 0.000000e+00 : f32
    %44 = vector.broadcast %cst_14 : f32 to vector<8x128xf32>
    %45 = arith.maximumf %43, %44 : vector<8x128xf32>
    %c0_15 = arith.constant 0 : index
    %c0_16 = arith.constant 0 : index
    %46 = vector.load %arg5[%c0_15, %c0_16] : memref<8x128xf32, #tpu.memory_space<vmem>>, vector<8x128xf32>
    tpu.vector_store %arg5[%c0_15, %c0_16], %45 {strides = array<i32>} : memref<8x128xf32, #tpu.memory_space<vmem>>, vector<8x128xf32>,
    return
  }
}

module attributes {stable_mosaic.version = 11 : i64} {
  func.func @_gemm_bn_relu_kernel(%arg0: memref<32x72xf32, #tpu.memory_space<vmem>>, %arg1: memref<72x128xf32, #tpu.memory_space<vmem>>, %arg2: memref<1x128xf32, #tpu.memory_space<vmem>>, %arg3: memref<1x32xf32, #tpu.memory_space<vmem>>, %arg4: memref<1x32xf32, #tpu.memory_space<vmem>>, %arg5: memref<32x128xf32, #tpu.memory_space<vmem>>) attributes {dimension_semantics = [], scalar_prefetch = 0 : i64, scratch_operands = 0 : i64, tpu.core_type = #tpu.core_type<tc>} {
    %c0 = arith.constant 0 : index
    %c0_0 = arith.constant 0 : index
    %0 = vector.load %arg0[%c0, %c0_0] : memref<32x72xf32, #tpu.memory_space<vmem>>, vector<32x72xf32>
    %c0_1 = arith.constant 0 : index
    %c0_2 = arith.constant 0 : index
    %1 = vector.load %arg1[%c0_1, %c0_2] : memref<72x128xf32, #tpu.memory_space<vmem>>, vector<72x128xf32>
    %cst = arith.constant dense<0.000000e+00> : vector<32x128xf32>
    %2 = tpu.matmul %0, %1, %cst {dimension_numbers = #tpu.dot_dimension_numbers<[1], [0], [0], [1], [0, 0, 1, 1], [], []>} : vector<32x72xf32>, vector<72x128xf32>, vector<32x128xf32> -> vector<32x128xf32>
    %c0_3 = arith.constant 0 : index
    %c0_4 = arith.constant 0 : index
    %3 = vector.load %arg2[%c0_3, %c0_4] : memref<1x128xf32, #tpu.memory_space<vmem>>, vector<1x128xf32>
    %4 = vector.broadcast %3 : vector<1x128xf32> to vector<32x128xf32>
    %5 = arith.addf %2, %4 : vector<32x128xf32>
    %cst_5 = arith.constant dense<0.000000e+00> : vector<128xf32>
    %6 = vector.multi_reduction <add>, %5, %cst_5 [0] : vector<32x128xf32> to vector<128xf32>
    %7 = vector.shape_cast %6 : vector<128xf32> to vector<1x128xf32>
    %8 = vector.extract_strided_slice %7 {offsets = [0, 0], sizes = [1, 32], strides = [1, 1]} : vector<1x128xf32> to vector<1x32xf32>
    %9 = vector.extract_strided_slice %7 {offsets = [0, 32], sizes = [1, 32], strides = [1, 1]} : vector<1x128xf32> to vector<1x32xf32>
    %10 = arith.addf %8, %9 : vector<1x32xf32>
    %11 = vector.extract_strided_slice %7 {offsets = [0, 64], sizes = [1, 32], strides = [1, 1]} : vector<1x128xf32> to vector<1x32xf32>
    %12 = arith.addf %10, %11 : vector<1x32xf32>
    %13 = vector.extract_strided_slice %7 {offsets = [0, 96], sizes = [1, 32], strides = [1, 1]} : vector<1x128xf32> to vector<1x32xf32>
    %14 = arith.addf %12, %13 : vector<1x32xf32>
    %cst_6 = arith.constant 7.812500e-03 : f32
    %15 = vector.broadcast %cst_6 : f32 to vector<1x32xf32>
    %16 = arith.mulf %14, %15 : vector<1x32xf32>
    %17 = tpu.concatenate %16, %16, %16, %16 in 1 : vector<1x32xf32>, vector<1x32xf32>, vector<1x32xf32>, vector<1x32xf32> -> vector<1x128xf32>
    %18 = vector.broadcast %17 : vector<1x128xf32> to vector<32x128xf32>
    %19 = arith.subf %5, %18 : vector<32x128xf32>
    %20 = arith.mulf %19, %19 : vector<32x128xf32>
    %cst_7 = arith.constant dense<0.000000e+00> : vector<128xf32>
    %21 = vector.multi_reduction <add>, %20, %cst_7 [0] : vector<32x128xf32> to vector<128xf32>
    %22 = vector.shape_cast %21 : vector<128xf32> to vector<1x128xf32>
    %23 = vector.extract_strided_slice %22 {offsets = [0, 0], sizes = [1, 32], strides = [1, 1]} : vector<1x128xf32> to vector<1x32xf32>
    %24 = vector.extract_strided_slice %22 {offsets = [0, 32], sizes = [1, 32], strides = [1, 1]} : vector<1x128xf32> to vector<1x32xf32>
    %25 = arith.addf %23, %24 : vector<1x32xf32>
    %26 = vector.extract_strided_slice %22 {offsets = [0, 64], sizes = [1, 32], strides = [1, 1]} : vector<1x128xf32> to vector<1x32xf32>
    %27 = arith.addf %25, %26 : vector<1x32xf32>
    %28 = vector.extract_strided_slice %22 {offsets = [0, 96], sizes = [1, 32], strides = [1, 1]} : vector<1x128xf32> to vector<1x32xf32>
    %29 = arith.addf %27, %28 : vector<1x32xf32>
    %cst_8 = arith.constant 7.812500e-03 : f32
    %30 = vector.broadcast %cst_8 : f32 to vector<1x32xf32>
    %31 = arith.mulf %29, %30 : vector<1x32xf32>
    %c0_9 = arith.constant 0 : index
    %c0_10 = arith.constant 0 : index
    %32 = vector.load %arg3[%c0_9, %c0_10] : memref<1x32xf32, #tpu.memory_space<vmem>>, vector<1x32xf32>
    %cst_11 = arith.constant 9.99999974E-6 : f32
    %33 = vector.broadcast %cst_11 : f32 to vector<1x32xf32>
    %34 = arith.addf %31, %33 : vector<1x32xf32>
    %35 = math.rsqrt %34 : vector<1x32xf32>
    %36 = arith.mulf %32, %35 : vector<1x32xf32>
    %37 = tpu.concatenate %36, %36, %36, %36 in 1 : vector<1x32xf32>, vector<1x32xf32>, vector<1x32xf32>, vector<1x32xf32> -> vector<1x128xf32>
    %c0_12 = arith.constant 0 : index
    %c0_13 = arith.constant 0 : index
    %38 = vector.load %arg4[%c0_12, %c0_13] : memref<1x32xf32, #tpu.memory_space<vmem>>, vector<1x32xf32>
    %39 = tpu.concatenate %38, %38, %38, %38 in 1 : vector<1x32xf32>, vector<1x32xf32>, vector<1x32xf32>, vector<1x32xf32> -> vector<1x128xf32>
    %40 = vector.broadcast %37 : vector<1x128xf32> to vector<32x128xf32>
    %41 = arith.mulf %19, %40 : vector<32x128xf32>
    %42 = vector.broadcast %39 : vector<1x128xf32> to vector<32x128xf32>
    %43 = arith.addf %41, %42 : vector<32x128xf32>
    %cst_14 = arith.constant 0.000000e+00 : f32
    %44 = vector.broadcast %cst_14 : f32 to vector<32x128xf32>
    %45 = arith.maximumf %43, %44 : vector<32x128xf32>
    %c0_15 = arith.constant 0 : index
    %c0_16 = arith.constant 0 : index
    %46 = vector.load %arg5[%c0_15, %c0_16] : memref<32x128xf32, #tpu.memory_space<vmem>>, vector<32x128xf32>
    tpu.vector_store %arg5[%c0_15, %c0_16], %45 {strides = array<i32>} : memref<32x128xf32, #tpu.memory_space<vmem>>, vector<32x128xf32>,
    return
  }
}

module attributes {stable_mosaic.version = 11 : i64} {
  func.func @_gemm_act_kernel(%arg0: memref<128x36xf32, #tpu.memory_space<vmem>>, %arg1: memref<36x128xf32, #tpu.memory_space<vmem>>, %arg2: memref<1x128xf32, #tpu.memory_space<vmem>>, %arg3: memref<128x128xf32, #tpu.memory_space<vmem>>) attributes {dimension_semantics = [], scalar_prefetch = 0 : i64, scratch_operands = 0 : i64, tpu.core_type = #tpu.core_type<tc>} {
    %c0 = arith.constant 0 : index
    %c0_0 = arith.constant 0 : index
    %0 = vector.load %arg0[%c0, %c0_0] : memref<128x36xf32, #tpu.memory_space<vmem>>, vector<128x36xf32>
    %c0_1 = arith.constant 0 : index
    %c0_2 = arith.constant 0 : index
    %1 = vector.load %arg1[%c0_1, %c0_2] : memref<36x128xf32, #tpu.memory_space<vmem>>, vector<36x128xf32>
    %cst = arith.constant dense<0.000000e+00> : vector<128x128xf32>
    %2 = tpu.matmul %0, %1, %cst {dimension_numbers = #tpu.dot_dimension_numbers<[1], [0], [0], [1], [0, 0, 1, 1], [], []>} : vector<128x36xf32>, vector<36x128xf32>, vector<128x128xf32> -> vector<128x128xf32>
    %c0_3 = arith.constant 0 : index
    %c0_4 = arith.constant 0 : index
    %3 = vector.load %arg2[%c0_3, %c0_4] : memref<1x128xf32, #tpu.memory_space<vmem>>, vector<1x128xf32>
    %4 = vector.broadcast %3 : vector<1x128xf32> to vector<128x128xf32>
    %5 = arith.addf %2, %4 : vector<128x128xf32>
    %6 = arith.negf %5 : vector<128x128xf32>
    %7 = math.exp %6 : vector<128x128xf32>
    %cst_5 = arith.constant 1.000000e+00 : f32
    %8 = vector.broadcast %cst_5 : f32 to vector<128x128xf32>
    %9 = arith.addf %8, %7 : vector<128x128xf32>
    %10 = arith.divf %8, %9 : vector<128x128xf32>
    %c0_6 = arith.constant 0 : index
    %c0_7 = arith.constant 0 : index
    %11 = vector.load %arg3[%c0_6, %c0_7] : memref<128x128xf32, #tpu.memory_space<vmem>>, vector<128x128xf32>
    tpu.vector_store %arg3[%c0_6, %c0_7], %10 {strides = array<i32>} : memref<128x128xf32, #tpu.memory_space<vmem>>, vector<128x128xf32>,
    return
  }
}

</mosaic_0001>

<llo_original>
// kernel: vae_forward.9
$region0: #{vae_forward.9}
  #allocation0 [shape = 'u32[]', space=smem, size = 0x4, offset = 0x4, fixed_abs, tag = 'smem constant byte address 0x4 - core index']
  #allocation1 [shape = 'u32[144,128]{1,0:T(1,128)}', space=vmem, size = 0x12000, scoped, tag = 'internal scratch']
  %s0 = inlined_call_operand.vmem [shape: f32[128,36], index: 0, kind: input, shape index: {}]
  %s1 = inlined_call_operand.vmem [shape: f32[36,128], index: 1, kind: input, shape index: {}]
  %s2 = inlined_call_operand.vmem [shape: f32[1,128], index: 2, kind: input, shape index: {}]
  %s3 = inlined_call_operand.vmem [shape: f32[1,128], index: 3, kind: input, shape index: {}]
  %s4 = inlined_call_operand.vmem [shape: f32[1,128], index: 4, kind: input, shape index: {}]
  %s5 = inlined_call_operand.vmem [shape: f32[128,128], index: 5, kind: output, shape index: {}]
  %s6 = sld [smem:[#allocation0]]
  $region30: #{vae_forward.9} parent=0
    _
  %s8 = ssub.s32 1, %s6
  %s9 = scalar_select 0, %s8, %s6
  // Predicated region
  $region2: #{vae_forward.9} parent=0 // pred_check
    _
  $region3: #{vae_forward.9} parent=0 // pred_check_branch
    %11 = sbr.rel (0) target = $region5
  $region4: #{vae_forward.9} parent=0 // pred_region
    _
  $region5: #{vae_forward.9} parent=0 // pred_fallthru
    _
  // Predicated region
  $region6: #{vae_forward.9} parent=0 // pred_check
    _
  $region7: #{vae_forward.9} parent=0 // pred_check_branch
    %13 = sbr.rel (0) target = $region9
  $region8: #{vae_forward.9} parent=0 // pred_region
    _
  $region9: #{vae_forward.9} parent=0 // pred_fallthru
    _
  // Predicated region
  $region10: #{vae_forward.9} parent=0 // pred_check
    _
  $region11: #{vae_forward.9} parent=0 // pred_check_branch
    %15 = sbr.rel (0) target = $region13
  $region12: #{vae_forward.9} parent=0 // pred_region
    _
  $region13: #{vae_forward.9} parent=0 // pred_fallthru
    _
  // Predicated region
  $region14: #{vae_forward.9} parent=0 // pred_check
    _
  $region15: #{vae_forward.9} parent=0 // pred_check_branch
    %17 = sbr.rel (0) target = $region17
  $region16: #{vae_forward.9} parent=0 // pred_region
    _
  $region17: #{vae_forward.9} parent=0 // pred_fallthru
    _
  // Predicated region
  $region18: #{vae_forward.9} parent=0 // pred_check
    _
  $region19: #{vae_forward.9} parent=0 // pred_check_branch
    %19 = sbr.rel (0) target = $region21
  $region20: #{vae_forward.9} parent=0 // pred_region
    _
  $region21: #{vae_forward.9} parent=0 // pred_fallthru
    _
  %v20 = vld [vmem:[%s0] sm:$0xff]
  %v21 = vld [vmem:[%s0 + $0x8] sm:$0xff]
  %v22 = vld [vmem:[%s0 + $0x10] sm:$0xff]
  %v23 = vld [vmem:[%s0 + $0x18] sm:$0xff]
  %v24 = vld [vmem:[%s0 + $0x20] sm:$0xff]
  %v25 = vld [vmem:[%s0 + $0x28] sm:$0xff]
  %v26 = vld [vmem:[%s0 + $0x30] sm:$0xff]
  %v27 = vld [vmem:[%s0 + $0x38] sm:$0xff]
  %v28 = vld [vmem:[%s0 + $0x40] sm:$0xff]
  %v29 = vld [vmem:[%s0 + $0x48] sm:$0xff]
  %v30 = vld [vmem:[%s0 + $0x50] sm:$0xff]
  %v31 = vld [vmem:[%s0 + $0x58] sm:$0xff]
  %v32 = vld [vmem:[%s0 + $0x60] sm:$0xff]
  %v33 = vld [vmem:[%s0 + $0x68] sm:$0xff]
  %v34 = vld [vmem:[%s0 + $0x70] sm:$0xff]
  %v35 = vld [vmem:[%s0 + $0x78] sm:$0xff]
  %v36 = vld [vmem:[%s1] sm:$0xff]
  %v37 = vld [vmem:[%s1 + $0x8] sm:$0xff]
  %v38 = vld [vmem:[%s1 + $0x10] sm:$0xff]
  %v39 = vld [vmem:[%s1 + $0x18] sm:$0xff]
  %v40 = vld [vmem:[%s1 + $0x20] sm:$0xf]
  %v41 = vld [vmem:[%s2] sm:$0x1]
  %v43 = vlaneseq
  %v44 = vshrl.u32 %v43, 7
  %v45 = vsub.s32 0, %v44
  %v46 = vrot.slane %v41, %v45
  %vm48 = vcmask 293888
  %v50 = vsel %vm48, %v20, 0
  %v53 = vsel %vm48, %v21, 0
  %v56 = vsel %vm48, %v22, 0
  %v59 = vsel %vm48, %v23, 0
  %v62 = vsel %vm48, %v24, 0
  %v65 = vsel %vm48, %v25, 0
  %v68 = vsel %vm48, %v26, 0
  %v71 = vsel %vm48, %v27, 0
  %v74 = vsel %vm48, %v28, 0
  %v77 = vsel %vm48, %v29, 0
  %v80 = vsel %vm48, %v30, 0
  %v83 = vsel %vm48, %v31, 0
  %v86 = vsel %vm48, %v32, 0
  %v89 = vsel %vm48, %v33, 0
  %v92 = vsel %vm48, %v34, 0
  %v95 = vsel %vm48, %v35, 0
  %vm97 = vcmask 1043456
  %v99 = vsel %vm97, %v40, 0
  %101 = vmatprep.subr.mxu0 0.0
  %102 = vmatpush1.msra.mxu0 0.0
  %103 = vmatprep.subr.mxu0 0.0
  %104 = vmatpush1.msra.mxu0 0.0
  %105 = vmatprep.subr.mxu0 0.0
  %106 = vmatpush1.msra.mxu0 0.0
  %107 = vmatprep.subr.mxu0 0.0
  %108 = vmatpush1.msra.mxu0 0.0
  %109 = vmatprep.subr.mxu0 0.0
  %110 = vmatpush1.msra.mxu0 0.0
  %111 = vmatprep.subr.mxu0 0.0
  %112 = vmatpush1.msra.mxu0 0.0
  %113 = vmatprep.subr.mxu0 0.0
  %114 = vmatpush1.msra.mxu0 0.0
  %115 = vmatprep.subr.mxu0 0.0
  %116 = vmatpush1.msra.mxu0 0.0
  %117 = vmatprep.subr.mxu0 0.0
  %118 = vmatpush1.msra.mxu0 0.0
  %119 = vmatprep.subr.mxu0 0.0
  %120 = vmatpush1.msra.mxu0 0.0
  %121 = vmatprep.subr.mxu0 0.0
  %122 = vmatpush1.msra.mxu0 0.0
  %123 = vmatprep.subr.mxu0 0.0
  %124 = vmatpush1.msra.mxu0 %v99
  %125 = vmatprep.subr.mxu0 0.0
  %126 = vmatpush1.msra.mxu0 %v39
  %127 = vmatprep.subr.mxu0 0.0
  %128 = vmatpush1.msra.mxu0 %v38
  %129 = vmatprep.subr.mxu0 0.0
  %130 = vmatpush1.msra.mxu0 %v37
  %131 = vmatprep.subr.mxu0 0.0
  %132 = vmatpush1.msra.mxu0 %v36
  %133 = vmatprep.subr.mxu0 0.0
  %134 = vmatpush2.msra.mxu0 0.0
  %135 = vmatprep.subr.mxu0 0.0
  %136 = vmatpush2.msra.mxu0 0.0
  %137 = vmatprep.subr.mxu0 0.0
  %138 = vmatpush2.msra.mxu0 0.0
  %139 = vmatprep.subr.mxu0 0.0
  %140 = vmatpush2.msra.mxu0 0.0
  %141 = vmatprep.subr.mxu0 0.0
  %142 = vmatpush2.msra.mxu0 0.0
  %143 = vmatprep.subr.mxu0 0.0
  %144 = vmatpush2.msra.mxu0 0.0
  %145 = vmatprep.subr.mxu0 0.0
  %146 = vmatpush2.msra.mxu0 0.0
  %147 = vmatprep.subr.mxu0 0.0
  %148 = vmatpush2.msra.mxu0 0.0
  %149 = vmatprep.subr.mxu0 0.0
  %150 = vmatpush2.msra.mxu0 0.0
  %151 = vmatprep.subr.mxu0 0.0
  %152 = vmatpush2.msra.mxu0 0.0
  %153 = vmatprep.subr.mxu0 0.0
  %154 = vmatpush2.msra.mxu0 0.0
  %155 = vmatprep.subr.mxu0 0.0
  %156 = vmatpush2.msra.mxu0 0.0
  %157 = vmatprep.subr.mxu0 0.0
  %158 = vmatpush2.msra.mxu0 0.0
  %159 = vmatprep.subr.mxu0 0.0
  %160 = vmatpush2.msra.mxu0 0.0
  %161 = vmatprep.subr.mxu0 0.0
  %162 = vmatpush2.msra.mxu0 0.0
  %163 = vmatprep.subr.mxu0 0.0
  %164 = vmatpush2.msra.mxu0 0.0
  %165 = vmatprep.mubr.f32.mxu0 0.0
  %166 = vmatmul.mubr.f32.gmra.mxu0 %v50
  %v167 = vpop.f32.mrf.mxu0
  %v168 = vadd.f32 %v46, %v167
  %v169 = vpop.f32.mrf.mxu0
  %170 = vmatprep.mubr.f32.mxu0 0.0
  %171 = vmatmul.mubr.f32.gmra.mxu0 %v53
  %v172 = vpop.f32.mrf.mxu0
  %v173 = vadd.f32 %v46, %v172
  %v174 = vpop.f32.mrf.mxu0
  %175 = vmatprep.mubr.f32.mxu0 0.0
  %176 = vmatmul.mubr.f32.gmra.mxu0 %v56
  %v177 = vpop.f32.mrf.mxu0
  %v178 = vadd.f32 %v46, %v177
  %v179 = vpop.f32.mrf.mxu0
  %180 = vmatprep.mubr.f32.mxu0 0.0
  %181 = vmatmul.mubr.f32.gmra.mxu0 %v59
  %v182 = vpop.f32.mrf.mxu0
  %v183 = vadd.f32 %v46, %v182
  %v184 = vpop.f32.mrf.mxu0
  %185 = vmatprep.mubr.f32.mxu0 0.0
  %186 = vmatmul.mubr.f32.gmra.mxu0 %v62
  %v187 = vpop.f32.mrf.mxu0
  %v188 = vadd.f32 %v46, %v187
  %v189 = vpop.f32.mrf.mxu0
  %190 = vmatprep.mubr.f32.mxu0 0.0
  %191 = vmatmul.mubr.f32.gmra.mxu0 %v65
  %v192 = vpop.f32.mrf.mxu0
  %v193 = vadd.f32 %v46, %v192
  %v194 = vpop.f32.mrf.mxu0
  %195 = vmatprep.mubr.f32.mxu0 0.0
  %196 = vmatmul.mubr.f32.gmra.mxu0 %v68
  %v197 = vpop.f32.mrf.mxu0
  %v198 = vadd.f32 %v46, %v197
  %v199 = vpop.f32.mrf.mxu0
  %200 = vmatprep.mubr.f32.mxu0 0.0
  %201 = vmatmul.mubr.f32.gmra.mxu0 %v71
  %v202 = vpop.f32.mrf.mxu0
  %v203 = vadd.f32 %v46, %v202
  %v204 = vpop.f32.mrf.mxu0
  %205 = vmatprep.mubr.f32.mxu0 0.0
  %206 = vmatmul.mubr.f32.gmra.mxu0 %v74
  %v207 = vpop.f32.mrf.mxu0
  %v208 = vadd.f32 %v46, %v207
  %v209 = vpop.f32.mrf.mxu0
  %210 = vmatprep.mubr.f32.mxu0 0.0
  %211 = vmatmul.mubr.f32.gmra.mxu0 %v77
  %v212 = vpop.f32.mrf.mxu0
  %v213 = vadd.f32 %v46, %v212
  %v214 = vpop.f32.mrf.mxu0
  %215 = vmatprep.mubr.f32.mxu0 0.0
  %216 = vmatmul.mubr.f32.gmra.mxu0 %v80
  %v217 = vpop.f32.mrf.mxu0
  %v218 = vadd.f32 %v46, %v217
  %v219 = vpop.f32.mrf.mxu0
  %220 = vmatprep.mubr.f32.mxu0 0.0
  %221 = vmatmul.mubr.f32.gmra.mxu0 %v83
  %v222 = vpop.f32.mrf.mxu0
  %v223 = vadd.f32 %v46, %v222
  %v224 = vpop.f32.mrf.mxu0
  %225 = vmatprep.mubr.f32.mxu0 0.0
  %226 = vmatmul.mubr.f32.gmra.mxu0 %v86
  %v227 = vpop.f32.mrf.mxu0
  %v228 = vadd.f32 %v46, %v227
  %v229 = vpop.f32.mrf.mxu0
  %230 = vmatprep.mubr.f32.mxu0 0.0
  %231 = vmatmul.mubr.f32.gmra.mxu0 %v89
  %v232 = vpop.f32.mrf.mxu0
  %v233 = vadd.f32 %v46, %v232
  %v234 = vpop.f32.mrf.mxu0
  %235 = vmatprep.mubr.f32.mxu0 0.0
  %236 = vmatmul.mubr.f32.gmra.mxu0 %v92
  %v237 = vpop.f32.mrf.mxu0
  %v238 = vadd.f32 %v46, %v237
  %v239 = vpop.f32.mrf.mxu0
  %240 = vmatprep.mubr.f32.mxu0 0.0
  %241 = vmatmul.mubr.f32.gmra.mxu0 %v95
  %v242 = vpop.f32.mrf.mxu0
  %v243 = vadd.f32 %v46, %v242
  %v244 = vpop.f32.mrf.mxu0
  %245 = vdwg.mxu0
  %v246 = vadd.f32 %v168, %v173
  %v247 = vadd.f32 %v246, %v178
  %v248 = vadd.f32 %v247, %v183
  %v249 = vadd.f32 %v248, %v188
  %v250 = vadd.f32 %v249, %v193
  %v251 = vadd.f32 %v250, %v198
  %v252 = vadd.f32 %v251, %v203
  %v253 = vadd.f32 %v252, %v208
  %v254 = vadd.f32 %v253, %v213
  %v255 = vadd.f32 %v254, %v218
  %v256 = vadd.f32 %v255, %v223
  %v257 = vadd.f32 %v256, %v228
  %v258 = vadd.f32 %v257, %v233
  %v259 = vadd.f32 %v258, %v238
  %v260 = vadd.f32 %v259, %v243
  %v261 = vrot.slane %v260, 4
  %v262 = vadd.f32 %v260, %v261
  %v263 = vrot.slane %v262, 2
  %v264 = vadd.f32 %v262, %v263
  %v265 = vrot.slane %v264, 1
  %v266 = vadd.f32 %v264, %v265
  %v267 = vmul.f32 %v266, 0.0078125
  %v268 = vsub.f32 %v168, %v267
  %v269 = vsub.f32 %v173, %v267
  %v270 = vsub.f32 %v178, %v267
  %v271 = vsub.f32 %v183, %v267
  %v272 = vsub.f32 %v188, %v267
  %v273 = vsub.f32 %v193, %v267
  %v274 = vsub.f32 %v198, %v267
  %v275 = vsub.f32 %v203, %v267
  %v276 = vsub.f32 %v208, %v267
  %v277 = vsub.f32 %v213, %v267
  %v278 = vsub.f32 %v218, %v267
  %v279 = vsub.f32 %v223, %v267
  %v280 = vsub.f32 %v228, %v267
  %v281 = vsub.f32 %v233, %v267
  %v282 = vsub.f32 %v238, %v267
  %v283 = vsub.f32 %v243, %v267
  %v284 = vmul.f32 %v268, %v268
  %v285 = vmul.f32 %v269, %v269
  %v286 = vmul.f32 %v270, %v270
  %v287 = vmul.f32 %v271, %v271
  %v288 = vmul.f32 %v272, %v272
  %v289 = vmul.f32 %v273, %v273
  %v290 = vmul.f32 %v274, %v274
  %v291 = vmul.f32 %v275, %v275
  %v292 = vmul.f32 %v276, %v276
  %v293 = vmul.f32 %v277, %v277
  %v294 = vmul.f32 %v278, %v278
  %v295 = vmul.f32 %v279, %v279
  %v296 = vmul.f32 %v280, %v280
  %v297 = vmul.f32 %v281, %v281
  %v298 = vmul.f32 %v282, %v282
  %v299 = vmul.f32 %v283, %v283
  %v300 = vadd.f32 %v284, %v285
  %v301 = vadd.f32 %v300, %v286
  %v302 = vadd.f32 %v301, %v287
  %v303 = vadd.f32 %v302, %v288
  %v304 = vadd.f32 %v303, %v289
  %v305 = vadd.f32 %v304, %v290
  %v306 = vadd.f32 %v305, %v291
  %v307 = vadd.f32 %v306, %v292
  %v308 = vadd.f32 %v307, %v293
  %v309 = vadd.f32 %v308, %v294
  %v310 = vadd.f32 %v309, %v295
  %v311 = vadd.f32 %v310, %v296
  %v312 = vadd.f32 %v311, %v297
  %v313 = vadd.f32 %v312, %v298
  %v314 = vadd.f32 %v313, %v299
  %v315 = vrot.slane %v314, 4
  %v316 = vadd.f32 %v314, %v315
  %v317 = vrot.slane %v316, 2
  %v318 = vadd.f32 %v316, %v317
  %v319 = vrot.slane %v318, 1
  %v320 = vadd.f32 %v318, %v319
  %v321 = vmul.f32 %v320, 0.0078125
  %v322 = vld [vmem:[%s3] sm:$0x1]
  %v323 = vadd.f32 %v321, 1e-05
  %v324 = vrsqrt.pop %v323
  %v325 = vmul.f32 %v322, %v324
  %v326 = vld [vmem:[%s4] sm:$0x1]
  %v328 = vlaneseq
  %v329 = vshrl.u32 %v328, 7
  %v330 = vsub.s32 0, %v329
  %v331 = vrot.slane %v325, %v330
  %v333 = vmul.f32 %v268, %v331
  %v334 = vmul.f32 %v269, %v331
  %v335 = vmul.f32 %v270, %v331
  %v336 = vmul.f32 %v271, %v331
  %v337 = vmul.f32 %v272, %v331
  %v338 = vmul.f32 %v273, %v331
  %v339 = vmul.f32 %v274, %v331
  %v340 = vmul.f32 %v275, %v331
  %v341 = vmul.f32 %v276, %v331
  %v342 = vmul.f32 %v277, %v331
  %v343 = vmul.f32 %v278, %v331
  %v344 = vmul.f32 %v279, %v331
  %v345 = vmul.f32 %v280, %v331
  %v346 = vmul.f32 %v281, %v331
  %v347 = vmul.f32 %v282, %v331
  %v348 = vmul.f32 %v283, %v331
  %v350 = vlaneseq
  %v351 = vshrl.u32 %v350, 7
  %v352 = vsub.s32 0, %v351
  %v353 = vrot.slane %v326, %v352
  %v355 = vadd.f32 %v333, %v353
  %v356 = vadd.f32 %v334, %v353
  %v357 = vadd.f32 %v335, %v353
  %v358 = vadd.f32 %v336, %v353
  %v359 = vadd.f32 %v337, %v353
  %v360 = vadd.f32 %v338, %v353
  %v361 = vadd.f32 %v339, %v353
  %v362 = vadd.f32 %v340, %v353
  %v363 = vadd.f32 %v341, %v353
  %v364 = vadd.f32 %v342, %v353
  %v365 = vadd.f32 %v343, %v353
  %v366 = vadd.f32 %v344, %v353
  %v367 = vadd.f32 %v345, %v353
  %v368 = vadd.f32 %v346, %v353
  %v369 = vadd.f32 %v347, %v353
  %v370 = vadd.f32 %v348, %v353
  %v371 = vmax.f32 %v355, 0.0
  %v372 = vmax.f32 %v356, 0.0
  %v373 = vmax.f32 %v357, 0.0
  %v374 = vmax.f32 %v358, 0.0
  %v375 = vmax.f32 %v359, 0.0
  %v376 = vmax.f32 %v360, 0.0
  %v377 = vmax.f32 %v361, 0.0
  %v378 = vmax.f32 %v362, 0.0
  %v379 = vmax.f32 %v363, 0.0
  %v380 = vmax.f32 %v364, 0.0
  %v381 = vmax.f32 %v365, 0.0
  %v382 = vmax.f32 %v366, 0.0
  %v383 = vmax.f32 %v367, 0.0
  %v384 = vmax.f32 %v368, 0.0
  %v385 = vmax.f32 %v369, 0.0
  %v386 = vmax.f32 %v370, 0.0
  %387 = vst [vmem:[%s5] sm:$0xff] %v371
  %388 = vst [vmem:[%s5 + $0x8] sm:$0xff] %v372
  %389 = vst [vmem:[%s5 + $0x10] sm:$0xff] %v373
  %390 = vst [vmem:[%s5 + $0x18] sm:$0xff] %v374
  %391 = vst [vmem:[%s5 + $0x20] sm:$0xff] %v375
  %392 = vst [vmem:[%s5 + $0x28] sm:$0xff] %v376
  %393 = vst [vmem:[%s5 + $0x30] sm:$0xff] %v377
  %394 = vst [vmem:[%s5 + $0x38] sm:$0xff] %v378
  %395 = vst [vmem:[%s5 + $0x40] sm:$0xff] %v379
  %396 = vst [vmem:[%s5 + $0x48] sm:$0xff] %v380
  %397 = vst [vmem:[%s5 + $0x50] sm:$0xff] %v381
  %398 = vst [vmem:[%s5 + $0x58] sm:$0xff] %v382
  %399 = vst [vmem:[%s5 + $0x60] sm:$0xff] %v383
  %400 = vst [vmem:[%s5 + $0x68] sm:$0xff] %v384
  %401 = vst [vmem:[%s5 + $0x70] sm:$0xff] %v385
  %402 = vst [vmem:[%s5 + $0x78] sm:$0xff] %v386
  // Predicated region
  $region22: #{vae_forward.9} parent=0 // pred_check
    _
  $region23: #{vae_forward.9} parent=0 // pred_check_branch
    %404 = sbr.rel (0) target = $region25
  $region24: #{vae_forward.9} parent=0 // pred_region
    _
  $region25: #{vae_forward.9} parent=0 // pred_fallthru
    _
  // Predicated region
  $region26: #{vae_forward.9} parent=0 // pred_check
    _
  $region27: #{vae_forward.9} parent=0 // pred_check_branch
    %406 = sbr.rel (0) target = $region29
  $region28: #{vae_forward.9} parent=0 // pred_region
    _
  $region29: #{vae_forward.9} parent=0 // pred_fallthru
    _

// kernel: vae_forward.10
$region0: #{vae_forward.10}
  #allocation0 [shape = 'u32[]', space=smem, size = 0x4, offset = 0x4, fixed_abs, tag = 'smem constant byte address 0x4 - core index']
  #allocation1 [shape = 'u32[144,128]{1,0:T(1,128)}', space=vmem, size = 0x12000, scoped, tag = 'internal scratch']
  %s0 = inlined_call_operand.vmem [shape: f32[32,36], index: 0, kind: input, shape index: {}]
  %s1 = inlined_call_operand.vmem [shape: f32[36,128], index: 1, kind: input, shape index: {}]
  %s2 = inlined_call_operand.vmem [shape: f32[1,128], index: 2, kind: input, shape index: {}]
  %s3 = inlined_call_operand.vmem [shape: f32[1,128], index: 3, kind: input, shape index: {}]
  %s4 = inlined_call_operand.vmem [shape: f32[1,128], index: 4, kind: input, shape index: {}]
  %s5 = inlined_call_operand.vmem [shape: f32[32,128], index: 5, kind: output, shape index: {}]
  %s6 = sld [smem:[#allocation0]]
  $region30: #{vae_forward.10} parent=0
    _
  %s8 = ssub.s32 1, %s6
  %s9 = scalar_select 0, %s8, %s6
  // Predicated region
  $region2: #{vae_forward.10} parent=0 // pred_check
    _
  $region3: #{vae_forward.10} parent=0 // pred_check_branch
    %11 = sbr.rel (0) target = $region5
  $region4: #{vae_forward.10} parent=0 // pred_region
    _
  $region5: #{vae_forward.10} parent=0 // pred_fallthru
    _
  // Predicated region
  $region6: #{vae_forward.10} parent=0 // pred_check
    _
  $region7: #{vae_forward.10} parent=0 // pred_check_branch
    %13 = sbr.rel (0) target = $region9
  $region8: #{vae_forward.10} parent=0 // pred_region
    _
  $region9: #{vae_forward.10} parent=0 // pred_fallthru
    _
  // Predicated region
  $region10: #{vae_forward.10} parent=0 // pred_check
    _
  $region11: #{vae_forward.10} parent=0 // pred_check_branch
    %15 = sbr.rel (0) target = $region13
  $region12: #{vae_forward.10} parent=0 // pred_region
    _
  $region13: #{vae_forward.10} parent=0 // pred_fallthru
    _
  // Predicated region
  $region14: #{vae_forward.10} parent=0 // pred_check
    _
  $region15: #{vae_forward.10} parent=0 // pred_check_branch
    %17 = sbr.rel (0) target = $region17
  $region16: #{vae_forward.10} parent=0 // pred_region
    _
  $region17: #{vae_forward.10} parent=0 // pred_fallthru
    _
  // Predicated region
  $region18: #{vae_forward.10} parent=0 // pred_check
    _
  $region19: #{vae_forward.10} parent=0 // pred_check_branch
    %19 = sbr.rel (0) target = $region21
  $region20: #{vae_forward.10} parent=0 // pred_region
    _
  $region21: #{vae_forward.10} parent=0 // pred_fallthru
    _
  %v20 = vld [vmem:[%s0] sm:$0xff]
  %v21 = vld [vmem:[%s0 + $0x8] sm:$0xff]
  %v22 = vld [vmem:[%s0 + $0x10] sm:$0xff]
  %v23 = vld [vmem:[%s0 + $0x18] sm:$0xff]
  %v24 = vld [vmem:[%s1] sm:$0xff]
  %v25 = vld [vmem:[%s1 + $0x8] sm:$0xff]
  %v26 = vld [vmem:[%s1 + $0x10] sm:$0xff]
  %v27 = vld [vmem:[%s1 + $0x18] sm:$0xff]
  %v28 = vld [vmem:[%s1 + $0x20] sm:$0xf]
  %v29 = vld [vmem:[%s2] sm:$0x1]
  %v31 = vlaneseq
  %v32 = vshrl.u32 %v31, 7
  %v33 = vsub.s32 0, %v32
  %v34 = vrot.slane %v29, %v33
  %vm36 = vcmask 293888
  %v38 = vsel %vm36, %v20, 0
  %v41 = vsel %vm36, %v21, 0
  %v44 = vsel %vm36, %v22, 0
  %v47 = vsel %vm36, %v23, 0
  %vm49 = vcmask 1043456
  %v51 = vsel %vm49, %v28, 0
  %53 = vmatprep.subr.mxu0 0.0
  %54 = vmatpush1.msra.mxu0 0.0
  %55 = vmatprep.subr.mxu0 0.0
  %56 = vmatpush1.msra.mxu0 0.0
  %57 = vmatprep.subr.mxu0 0.0
  %58 = vmatpush1.msra.mxu0 0.0
  %59 = vmatprep.subr.mxu0 0.0
  %60 = vmatpush1.msra.mxu0 0.0
  %61 = vmatprep.subr.mxu0 0.0
  %62 = vmatpush1.msra.mxu0 0.0
  %63 = vmatprep.subr.mxu0 0.0
  %64 = vmatpush1.msra.mxu0 0.0
  %65 = vmatprep.subr.mxu0 0.0
  %66 = vmatpush1.msra.mxu0 0.0
  %67 = vmatprep.subr.mxu0 0.0
  %68 = vmatpush1.msra.mxu0 0.0
  %69 = vmatprep.subr.mxu0 0.0
  %70 = vmatpush1.msra.mxu0 0.0
  %71 = vmatprep.subr.mxu0 0.0
  %72 = vmatpush1.msra.mxu0 0.0
  %73 = vmatprep.subr.mxu0 0.0
  %74 = vmatpush1.msra.mxu0 0.0
  %75 = vmatprep.subr.mxu0 0.0
  %76 = vmatpush1.msra.mxu0 %v51
  %77 = vmatprep.subr.mxu0 0.0
  %78 = vmatpush1.msra.mxu0 %v27
  %79 = vmatprep.subr.mxu0 0.0
  %80 = vmatpush1.msra.mxu0 %v26
  %81 = vmatprep.subr.mxu0 0.0
  %82 = vmatpush1.msra.mxu0 %v25
  %83 = vmatprep.subr.mxu0 0.0
  %84 = vmatpush1.msra.mxu0 %v24
  %85 = vmatprep.subr.mxu0 0.0
  %86 = vmatpush2.msra.mxu0 0.0
  %87 = vmatprep.subr.mxu0 0.0
  %88 = vmatpush2.msra.mxu0 0.0
  %89 = vmatprep.subr.mxu0 0.0
  %90 = vmatpush2.msra.mxu0 0.0
  %91 = vmatprep.subr.mxu0 0.0
  %92 = vmatpush2.msra.mxu0 0.0
  %93 = vmatprep.subr.mxu0 0.0
  %94 = vmatpush2.msra.mxu0 0.0
  %95 = vmatprep.subr.mxu0 0.0
  %96 = vmatpush2.msra.mxu0 0.0
  %97 = vmatprep.subr.mxu0 0.0
  %98 = vmatpush2.msra.mxu0 0.0
  %99 = vmatprep.subr.mxu0 0.0
  %100 = vmatpush2.msra.mxu0 0.0
  %101 = vmatprep.subr.mxu0 0.0
  %102 = vmatpush2.msra.mxu0 0.0
  %103 = vmatprep.subr.mxu0 0.0
  %104 = vmatpush2.msra.mxu0 0.0
  %105 = vmatprep.subr.mxu0 0.0
  %106 = vmatpush2.msra.mxu0 0.0
  %107 = vmatprep.subr.mxu0 0.0
  %108 = vmatpush2.msra.mxu0 0.0
  %109 = vmatprep.subr.mxu0 0.0
  %110 = vmatpush2.msra.mxu0 0.0
  %111 = vmatprep.subr.mxu0 0.0
  %112 = vmatpush2.msra.mxu0 0.0
  %113 = vmatprep.subr.mxu0 0.0
  %114 = vmatpush2.msra.mxu0 0.0
  %115 = vmatprep.subr.mxu0 0.0
  %116 = vmatpush2.msra.mxu0 0.0
  %117 = vmatprep.mubr.f32.mxu0 0.0
  %118 = vmatmul.mubr.f32.gmra.mxu0 %v38
  %v119 = vpop.f32.mrf.mxu0
  %v120 = vadd.f32 %v34, %v119
  %v121 = vpop.f32.mrf.mxu0
  %122 = vmatprep.mubr.f32.mxu0 0.0
  %123 = vmatmul.mubr.f32.gmra.mxu0 %v41
  %v124 = vpop.f32.mrf.mxu0
  %v125 = vadd.f32 %v34, %v124
  %v126 = vpop.f32.mrf.mxu0
  %127 = vmatprep.mubr.f32.mxu0 0.0
  %128 = vmatmul.mubr.f32.gmra.mxu0 %v44
  %v129 = vpop.f32.mrf.mxu0
  %v130 = vadd.f32 %v34, %v129
  %v131 = vpop.f32.mrf.mxu0
  %132 = vmatprep.mubr.f32.mxu0 0.0
  %133 = vmatmul.mubr.f32.gmra.mxu0 %v47
  %v134 = vpop.f32.mrf.mxu0
  %v135 = vadd.f32 %v34, %v134
  %v136 = vpop.f32.mrf.mxu0
  %137 = vdwg.mxu0
  %v138 = vadd.f32 %v120, %v125
  %v139 = vadd.f32 %v138, %v130
  %v140 = vadd.f32 %v139, %v135
  %v141 = vrot.slane %v140, 4
  %v142 = vadd.f32 %v140, %v141
  %v143 = vrot.slane %v142, 2
  %v144 = vadd.f32 %v142, %v143
  %v145 = vrot.slane %v144, 1
  %v146 = vadd.f32 %v144, %v145
  %v147 = vmul.f32 %v146, 0.03125
  %v148 = vsub.f32 %v120, %v147
  %v149 = vsub.f32 %v125, %v147
  %v150 = vsub.f32 %v130, %v147
  %v151 = vsub.f32 %v135, %v147
  %v152 = vmul.f32 %v148, %v148
  %v153 = vmul.f32 %v149, %v149
  %v154 = vmul.f32 %v150, %v150
  %v155 = vmul.f32 %v151, %v151
  %v156 = vadd.f32 %v152, %v153
  %v157 = vadd.f32 %v156, %v154
  %v158 = vadd.f32 %v157, %v155
  %v159 = vrot.slane %v158, 4
  %v160 = vadd.f32 %v158, %v159
  %v161 = vrot.slane %v160, 2
  %v162 = vadd.f32 %v160, %v161
  %v163 = vrot.slane %v162, 1
  %v164 = vadd.f32 %v162, %v163
  %v165 = vmul.f32 %v164, 0.03125
  %v166 = vld [vmem:[%s3] sm:$0x1]
  %v167 = vadd.f32 %v165, 1e-05
  %v168 = vrsqrt.pop %v167
  %v169 = vmul.f32 %v166, %v168
  %v170 = vld [vmem:[%s4] sm:$0x1]
  %v172 = vlaneseq
  %v173 = vshrl.u32 %v172, 7
  %v174 = vsub.s32 0, %v173
  %v175 = vrot.slane %v169, %v174
  %v177 = vmul.f32 %v148, %v175
  %v178 = vmul.f32 %v149, %v175
  %v179 = vmul.f32 %v150, %v175
  %v180 = vmul.f32 %v151, %v175
  %v182 = vlaneseq
  %v183 = vshrl.u32 %v182, 7
  %v184 = vsub.s32 0, %v183
  %v185 = vrot.slane %v170, %v184
  %v187 = vadd.f32 %v177, %v185
  %v188 = vadd.f32 %v178, %v185
  %v189 = vadd.f32 %v179, %v185
  %v190 = vadd.f32 %v180, %v185
  %v191 = vmax.f32 %v187, 0.0
  %v192 = vmax.f32 %v188, 0.0
  %v193 = vmax.f32 %v189, 0.0
  %v194 = vmax.f32 %v190, 0.0
  %195 = vst [vmem:[%s5] sm:$0xff] %v191
  %196 = vst [vmem:[%s5 + $0x8] sm:$0xff] %v192
  %197 = vst [vmem:[%s5 + $0x10] sm:$0xff] %v193
  %198 = vst [vmem:[%s5 + $0x18] sm:$0xff] %v194
  // Predicated region
  $region22: #{vae_forward.10} parent=0 // pred_check
    _
  $region23: #{vae_forward.10} parent=0 // pred_check_branch
    %200 = sbr.rel (0) target = $region25
  $region24: #{vae_forward.10} parent=0 // pred_region
    _
  $region25: #{vae_forward.10} parent=0 // pred_fallthru
    _
  // Predicated region
  $region26: #{vae_forward.10} parent=0 // pred_check
    _
  $region27: #{vae_forward.10} parent=0 // pred_check_branch
    %202 = sbr.rel (0) target = $region29
  $region28: #{vae_forward.10} parent=0 // pred_region
    _
  $region29: #{vae_forward.10} parent=0 // pred_fallthru
    _

// kernel: mul.20
$region0: #{mul.20}
  %s0 = inlined_call_operand.vmem [shape: f32[2,20], index: 0, kind: input, shape index: {}]
  %s1 = inlined_call_operand.vmem [shape: f32[2,10,2], index: 1, kind: output, shape index: {}]
  $region1: #{mul.20} parent=0
    #allocation0 [shape = 'u8[4096]{0}', space=vmem, size = 0x1000, scoped, tag = 'scoped mem for input reshape']
    %s3 = sshll.u32 1, 2
    %s4 = ssub.s32 %s3, 1
    %v5 = vld [vmem:[%s0] sm:%s4]
    %6 = vst [vmem:[#allocation0] sm:%s4] %v5
    %v7 = vld [vmem:[#allocation0] sm:$0x3]
    %vm8 = vcmask 15360
    %9 = vst.msk [vmem:[%s1] ss:$16 sm:$0x3] %vm8, %v7
    %v10 = vld [vmem:[#allocation0] sm:$0x3]
    %11 = vrot.lane.b32.xlu0 %v10, 126
    %v12 = vpop.permute.xlu0 %11
    %vm13 = vcmask 15360
    %s14 = scalar_lea.vmem %s1, 1
    %15 = vst.msk [vmem:[%s14] ss:$16 sm:$0x3] %vm13, %v12
    %v16 = vld [vmem:[#allocation0] sm:$0x3]
    %17 = vrot.lane.b32.xlu0 %v16, 124
    %v18 = vpop.permute.xlu0 %17
    %vm19 = vcmask 15360
    %s20 = scalar_lea.vmem %s1, 2
    %21 = vst.msk [vmem:[%s20] ss:$16 sm:$0x3] %vm19, %v18
    %v22 = vld [vmem:[#allocation0] sm:$0x3]
    %23 = vrot.lane.b32.xlu0 %v22, 122
    %v24 = vpop.permute.xlu0 %23
    %vm25 = vcmask 15360
    %s26 = scalar_lea.vmem %s1, 3
    %27 = vst.msk [vmem:[%s26] ss:$16 sm:$0x3] %vm25, %v24
    %v28 = vld [vmem:[#allocation0] sm:$0x3]
    %29 = vrot.lane.b32.xlu0 %v28, 120
    %v30 = vpop.permute.xlu0 %29
    %vm31 = vcmask 15360
    %s32 = scalar_lea.vmem %s1, 4
    %33 = vst.msk [vmem:[%s32] ss:$16 sm:$0x3] %vm31, %v30
    %v34 = vld [vmem:[#allocation0] sm:$0x3]
    %35 = vrot.lane.b32.xlu0 %v34, 118
    %v36 = vpop.permute.xlu0 %35
    %vm37 = vcmask 15360
    %s38 = scalar_lea.vmem %s1, 5
    %39 = vst.msk [vmem:[%s38] ss:$16 sm:$0x3] %vm37, %v36
    %v40 = vld [vmem:[#allocation0] sm:$0x3]
    %41 = vrot.lane.b32.xlu0 %v40, 116
    %v42 = vpop.permute.xlu0 %41
    %vm43 = vcmask 15360
    %s44 = scalar_lea.vmem %s1, 6
    %45 = vst.msk [vmem:[%s44] ss:$16 sm:$0x3] %vm43, %v42
    %v46 = vld [vmem:[#allocation0] sm:$0x3]
    %47 = vrot.lane.b32.xlu0 %v46, 114
    %v48 = vpop.permute.xlu0 %47
    %vm49 = vcmask 15360
    %s50 = scalar_lea.vmem %s1, 7
    %51 = vst.msk [vmem:[%s50] ss:$16 sm:$0x3] %vm49, %v48
    %v52 = vld [vmem:[#allocation0] sm:$0x3]
    %53 = vrot.lane.b32.xlu0 %v52, 112
    %v54 = vpop.permute.xlu0 %53
    %vm55 = vcmask 15360
    %s56 = scalar_lea.vmem %s1, 8
    %57 = vst.msk [vmem:[%s56] ss:$16 sm:$0x3] %vm55, %v54
    %v58 = vld [vmem:[#allocation0] sm:$0x3]
    %59 = vrot.lane.b32.xlu0 %v58, 110
    %v60 = vpop.permute.xlu0 %59
    %vm61 = vcmask 15360
    %s62 = scalar_lea.vmem %s1, 9
    %63 = vst.msk [vmem:[%s62] ss:$16 sm:$0x3] %vm61, %v60

// kernel: vae_forward.11
$region0: #{vae_forward.11}
  #allocation0 [shape = 'u32[]', space=smem, size = 0x4, offset = 0x4, fixed_abs, tag = 'smem constant byte address 0x4 - core index']
  #allocation1 [shape = 'u32[144,128]{1,0:T(1,128)}', space=vmem, size = 0x12000, scoped, tag = 'internal scratch']
  %s0 = inlined_call_operand.vmem [shape: f32[8,72], index: 0, kind: input, shape index: {}]
  %s1 = inlined_call_operand.vmem [shape: f32[72,128], index: 1, kind: input, shape index: {}]
  %s2 = inlined_call_operand.vmem [shape: f32[1,128], index: 2, kind: input, shape index: {}]
  %s3 = inlined_call_operand.vmem [shape: f32[8,128], index: 3, kind: output, shape index: {}]
  %s4 = sld [smem:[#allocation0]]
  $region22: #{vae_forward.11} parent=0
    _
  %s6 = ssub.s32 1, %s4
  %s7 = scalar_select 0, %s6, %s4
  // Predicated region
  $region2: #{vae_forward.11} parent=0 // pred_check
    _
  $region3: #{vae_forward.11} parent=0 // pred_check_branch
    %9 = sbr.rel (0) target = $region5
  $region4: #{vae_forward.11} parent=0 // pred_region
    _
  $region5: #{vae_forward.11} parent=0 // pred_fallthru
    _
  // Predicated region
  $region6: #{vae_forward.11} parent=0 // pred_check
    _
  $region7: #{vae_forward.11} parent=0 // pred_check_branch
    %11 = sbr.rel (0) target = $region9
  $region8: #{vae_forward.11} parent=0 // pred_region
    _
  $region9: #{vae_forward.11} parent=0 // pred_fallthru
    _
  // Predicated region
  $region10: #{vae_forward.11} parent=0 // pred_check
    _
  $region11: #{vae_forward.11} parent=0 // pred_check_branch
    %13 = sbr.rel (0) target = $region13
  $region12: #{vae_forward.11} parent=0 // pred_region
    _
  $region13: #{vae_forward.11} parent=0 // pred_fallthru
    _
  %v14 = vld [vmem:[%s0] sm:$0xff]
  %v15 = vld [vmem:[%s1] sm:$0xff]
  %v16 = vld [vmem:[%s1 + $0x8] sm:$0xff]
  %v17 = vld [vmem:[%s1 + $0x10] sm:$0xff]
  %v18 = vld [vmem:[%s1 + $0x18] sm:$0xff]
  %v19 = vld [vmem:[%s1 + $0x20] sm:$0xff]
  %v20 = vld [vmem:[%s1 + $0x28] sm:$0xff]
  %v21 = vld [vmem:[%s1 + $0x30] sm:$0xff]
  %v22 = vld [vmem:[%s1 + $0x38] sm:$0xff]
  %v23 = vld [vmem:[%s1 + $0x40] sm:$0xff]
  %v24 = vld [vmem:[%s2] sm:$0x1]
  %v26 = vlaneseq
  %v27 = vshrl.u32 %v26, 7
  %v28 = vsub.s32 0, %v27
  %v29 = vrot.slane %v24, %v28
  %vm31 = vcmask 588800
  %v33 = vsel %vm31, %v14, 0
  %35 = vmatprep.subr.mxu0 0.0
  %36 = vmatpush1.msra.mxu0 0.0
  %37 = vmatprep.subr.mxu0 0.0
  %38 = vmatpush1.msra.mxu0 0.0
  %39 = vmatprep.subr.mxu0 0.0
  %40 = vmatpush1.msra.mxu0 0.0
  %41 = vmatprep.subr.mxu0 0.0
  %42 = vmatpush1.msra.mxu0 0.0
  %43 = vmatprep.subr.mxu0 0.0
  %44 = vmatpush1.msra.mxu0 0.0
  %45 = vmatprep.subr.mxu0 0.0
  %46 = vmatpush1.msra.mxu0 0.0
  %47 = vmatprep.subr.mxu0 0.0
  %48 = vmatpush1.msra.mxu0 0.0
  %49 = vmatprep.subr.mxu0 0.0
  %50 = vmatpush1.msra.mxu0 %v23
  %51 = vmatprep.subr.mxu0 0.0
  %52 = vmatpush1.msra.mxu0 %v22
  %53 = vmatprep.subr.mxu0 0.0
  %54 = vmatpush1.msra.mxu0 %v21
  %55 = vmatprep.subr.mxu0 0.0
  %56 = vmatpush1.msra.mxu0 %v20
  %57 = vmatprep.subr.mxu0 0.0
  %58 = vmatpush1.msra.mxu0 %v19
  %59 = vmatprep.subr.mxu0 0.0
  %60 = vmatpush1.msra.mxu0 %v18
  %61 = vmatprep.subr.mxu0 0.0
  %62 = vmatpush1.msra.mxu0 %v17
  %63 = vmatprep.subr.mxu0 0.0
  %64 = vmatpush1.msra.mxu0 %v16
  %65 = vmatprep.subr.mxu0 0.0
  %66 = vmatpush1.msra.mxu0 %v15
  %67 = vmatprep.subr.mxu0 0.0
  %68 = vmatpush2.msra.mxu0 0.0
  %69 = vmatprep.subr.mxu0 0.0
  %70 = vmatpush2.msra.mxu0 0.0
  %71 = vmatprep.subr.mxu0 0.0
  %72 = vmatpush2.msra.mxu0 0.0
  %73 = vmatprep.subr.mxu0 0.0
  %74 = vmatpush2.msra.mxu0 0.0
  %75 = vmatprep.subr.mxu0 0.0
  %76 = vmatpush2.msra.mxu0 0.0
  %77 = vmatprep.subr.mxu0 0.0
  %78 = vmatpush2.msra.mxu0 0.0
  %79 = vmatprep.subr.mxu0 0.0
  %80 = vmatpush2.msra.mxu0 0.0
  %81 = vmatprep.subr.mxu0 0.0
  %82 = vmatpush2.msra.mxu0 0.0
  %83 = vmatprep.subr.mxu0 0.0
  %84 = vmatpush2.msra.mxu0 0.0
  %85 = vmatprep.subr.mxu0 0.0
  %86 = vmatpush2.msra.mxu0 0.0
  %87 = vmatprep.subr.mxu0 0.0
  %88 = vmatpush2.msra.mxu0 0.0
  %89 = vmatprep.subr.mxu0 0.0
  %90 = vmatpush2.msra.mxu0 0.0
  %91 = vmatprep.subr.mxu0 0.0
  %92 = vmatpush2.msra.mxu0 0.0
  %93 = vmatprep.subr.mxu0 0.0
  %94 = vmatpush2.msra.mxu0 0.0
  %95 = vmatprep.subr.mxu0 0.0
  %96 = vmatpush2.msra.mxu0 0.0
  %97 = vmatprep.subr.mxu0 0.0
  %98 = vmatpush2.msra.mxu0 0.0
  %99 = vmatprep.mubr.f32.mxu0 0.0
  %100 = vmatmul.mubr.f32.gmra.mxu0 %v33
  %v101 = vpop.f32.mrf.mxu0
  %v102 = vadd.f32 %v29, %v101
  %v103 = vpop.f32.mrf.mxu0
  %104 = vdwg.mxu0
  %105 = vst [vmem:[%s3] sm:$0xff] %v102
  // Predicated region
  $region14: #{vae_forward.11} parent=0 // pred_check
    _
  $region15: #{vae_forward.11} parent=0 // pred_check_branch
    %107 = sbr.rel (0) target = $region17
  $region16: #{vae_forward.11} parent=0 // pred_region
    _
  $region17: #{vae_forward.11} parent=0 // pred_fallthru
    _
  // Predicated region
  $region18: #{vae_forward.11} parent=0 // pred_check
    _
  $region19: #{vae_forward.11} parent=0 // pred_check_branch
    %109 = sbr.rel (0) target = $region21
  $region20: #{vae_forward.11} parent=0 // pred_region
    _
  $region21: #{vae_forward.11} parent=0 // pred_fallthru
    _

// kernel: vae_forward.12
$region0: #{vae_forward.12}
  #allocation0 [shape = 'u32[]', space=smem, size = 0x4, offset = 0x4, fixed_abs, tag = 'smem constant byte address 0x4 - core index']
  #allocation1 [shape = 'u32[144,128]{1,0:T(1,128)}', space=vmem, size = 0x12000, scoped, tag = 'internal scratch']
  %s0 = inlined_call_operand.vmem [shape: f32[2,64], index: 0, kind: input, shape index: {}]
  %s1 = inlined_call_operand.vmem [shape: f32[64,128], index: 1, kind: input, shape index: {}]
  %s2 = inlined_call_operand.vmem [shape: f32[1,128], index: 2, kind: input, shape index: {}]
  %s3 = inlined_call_operand.vmem [shape: f32[2,128], index: 3, kind: output, shape index: {}]
  %s4 = sld [smem:[#allocation0]]
  $region22: #{vae_forward.12} parent=0
    _
  %s6 = ssub.s32 1, %s4
  %s7 = scalar_select 0, %s6, %s4
  // Predicated region
  $region2: #{vae_forward.12} parent=0 // pred_check
    _
  $region3: #{vae_forward.12} parent=0 // pred_check_branch
    %9 = sbr.rel (0) target = $region5
  $region4: #{vae_forward.12} parent=0 // pred_region
    _
  $region5: #{vae_forward.12} parent=0 // pred_fallthru
    _
  // Predicated region
  $region6: #{vae_forward.12} parent=0 // pred_check
    _
  $region7: #{vae_forward.12} parent=0 // pred_check_branch
    %11 = sbr.rel (0) target = $region9
  $region8: #{vae_forward.12} parent=0 // pred_region
    _
  $region9: #{vae_forward.12} parent=0 // pred_fallthru
    _
  // Predicated region
  $region10: #{vae_forward.12} parent=0 // pred_check
    _
  $region11: #{vae_forward.12} parent=0 // pred_check_branch
    %13 = sbr.rel (0) target = $region13
  $region12: #{vae_forward.12} parent=0 // pred_region
    _
  $region13: #{vae_forward.12} parent=0 // pred_fallthru
    _
  %v14 = vld [vmem:[%s0] sm:$0x3]
  %v15 = vld [vmem:[%s1] sm:$0xff]
  %v16 = vld [vmem:[%s1 + $0x8] sm:$0xff]
  %v17 = vld [vmem:[%s1 + $0x10] sm:$0xff]
  %v18 = vld [vmem:[%s1 + $0x18] sm:$0xff]
  %v19 = vld [vmem:[%s1 + $0x20] sm:$0xff]
  %v20 = vld [vmem:[%s1 + $0x28] sm:$0xff]
  %v21 = vld [vmem:[%s1 + $0x30] sm:$0xff]
  %v22 = vld [vmem:[%s1 + $0x38] sm:$0xff]
  %v23 = vld [vmem:[%s2] sm:$0x1]
  %v25 = vlaneseq
  %v26 = vshrl.u32 %v25, 7
  %v27 = vsub.s32 0, %v26
  %v28 = vrot.slane %v23, %v27
  %vm30 = vcmask 523264
  %v32 = vsel %vm30, %v14, 0
  %34 = vmatprep.subr.mxu0 0.0
  %35 = vmatpush1.msra.mxu0 0.0
  %36 = vmatprep.subr.mxu0 0.0
  %37 = vmatpush1.msra.mxu0 0.0
  %38 = vmatprep.subr.mxu0 0.0
  %39 = vmatpush1.msra.mxu0 0.0
  %40 = vmatprep.subr.mxu0 0.0
  %41 = vmatpush1.msra.mxu0 0.0
  %42 = vmatprep.subr.mxu0 0.0
  %43 = vmatpush1.msra.mxu0 0.0
  %44 = vmatprep.subr.mxu0 0.0
  %45 = vmatpush1.msra.mxu0 0.0
  %46 = vmatprep.subr.mxu0 0.0
  %47 = vmatpush1.msra.mxu0 0.0
  %48 = vmatprep.subr.mxu0 0.0
  %49 = vmatpush1.msra.mxu0 0.0
  %50 = vmatprep.subr.mxu0 0.0
  %51 = vmatpush1.msra.mxu0 %v22
  %52 = vmatprep.subr.mxu0 0.0
  %53 = vmatpush1.msra.mxu0 %v21
  %54 = vmatprep.subr.mxu0 0.0
  %55 = vmatpush1.msra.mxu0 %v20
  %56 = vmatprep.subr.mxu0 0.0
  %57 = vmatpush1.msra.mxu0 %v19
  %58 = vmatprep.subr.mxu0 0.0
  %59 = vmatpush1.msra.mxu0 %v18
  %60 = vmatprep.subr.mxu0 0.0
  %61 = vmatpush1.msra.mxu0 %v17
  %62 = vmatprep.subr.mxu0 0.0
  %63 = vmatpush1.msra.mxu0 %v16
  %64 = vmatprep.subr.mxu0 0.0
  %65 = vmatpush1.msra.mxu0 %v15
  %66 = vmatprep.subr.mxu0 0.0
  %67 = vmatpush2.msra.mxu0 0.0
  %68 = vmatprep.subr.mxu0 0.0
  %69 = vmatpush2.msra.mxu0 0.0
  %70 = vmatprep.subr.mxu0 0.0
  %71 = vmatpush2.msra.mxu0 0.0
  %72 = vmatprep.subr.mxu0 0.0
  %73 = vmatpush2.msra.mxu0 0.0
  %74 = vmatprep.subr.mxu0 0.0
  %75 = vmatpush2.msra.mxu0 0.0
  %76 = vmatprep.subr.mxu0 0.0
  %77 = vmatpush2.msra.mxu0 0.0
  %78 = vmatprep.subr.mxu0 0.0
  %79 = vmatpush2.msra.mxu0 0.0
  %80 = vmatprep.subr.mxu0 0.0
  %81 = vmatpush2.msra.mxu0 0.0
  %82 = vmatprep.subr.mxu0 0.0
  %83 = vmatpush2.msra.mxu0 0.0
  %84 = vmatprep.subr.mxu0 0.0
  %85 = vmatpush2.msra.mxu0 0.0
  %86 = vmatprep.subr.mxu0 0.0
  %87 = vmatpush2.msra.mxu0 0.0
  %88 = vmatprep.subr.mxu0 0.0
  %89 = vmatpush2.msra.mxu0 0.0
  %90 = vmatprep.subr.mxu0 0.0
  %91 = vmatpush2.msra.mxu0 0.0
  %92 = vmatprep.subr.mxu0 0.0
  %93 = vmatpush2.msra.mxu0 0.0
  %94 = vmatprep.subr.mxu0 0.0
  %95 = vmatpush2.msra.mxu0 0.0
  %96 = vmatprep.subr.mxu0 0.0
  %97 = vmatpush2.msra.mxu0 0.0
  %98 = vmatprep.mubr.f32.mxu0 0.0
  %99 = vmatmul.mubr.f32.gmra.mxu0 %v32
  %v100 = vpop.f32.mrf.mxu0
  %v101 = vadd.f32 %v28, %v100
  %v102 = vpop.f32.mrf.mxu0
  %103 = vdwg.mxu0
  %104 = vst [vmem:[%s3] sm:$0x3] %v101
  // Predicated region
  $region14: #{vae_forward.12} parent=0 // pred_check
    _
  $region15: #{vae_forward.12} parent=0 // pred_check_branch
    %106 = sbr.rel (0) target = $region17
  $region16: #{vae_forward.12} parent=0 // pred_region
    _
  $region17: #{vae_forward.12} parent=0 // pred_fallthru
    _
  // Predicated region
  $region18: #{vae_forward.12} parent=0 // pred_check
    _
  $region19: #{vae_forward.12} parent=0 // pred_check_branch
    %108 = sbr.rel (0) target = $region21
  $region20: #{vae_forward.12} parent=0 // pred_region
    _
  $region21: #{vae_forward.12} parent=0 // pred_fallthru
    _

// kernel: vae_forward.13
$region0: #{vae_forward.13}
  #allocation0 [shape = 'u32[]', space=smem, size = 0x4, offset = 0x4, fixed_abs, tag = 'smem constant byte address 0x4 - core index']
  #allocation1 [shape = 'u32[144,128]{1,0:T(1,128)}', space=vmem, size = 0x12000, scoped, tag = 'internal scratch']
  %s0 = inlined_call_operand.vmem [shape: f32[2,20,20], index: 0, kind: input, shape index: {}]
  %s1 = inlined_call_operand.vmem [shape: f32[2,20,20], index: 1, kind: output, shape index: {}]
  %s2 = sld [smem:[#allocation0]]
  $region14: #{vae_forward.13} parent=0
    _
  %s4 = ssub.s32 1, %s2
  %s5 = scalar_select 0, %s4, %s2
  // Predicated region
  $region2: #{vae_forward.13} parent=0 // pred_check
    _
  $region3: #{vae_forward.13} parent=0 // pred_check_branch
    %7 = sbr.rel (0) target = $region5
  $region4: #{vae_forward.13} parent=0 // pred_region
    _
  $region5: #{vae_forward.13} parent=0 // pred_fallthru
    _
  %v8 = vld [vmem:[%s0] sm:$0xff]
  %v9 = vld [vmem:[%s0 + $0x8] sm:$0xff]
  %v10 = vld [vmem:[%s0 + $0x10] sm:$0xf]
  %v11 = vld [vmem:[%s0 + $0x18] sm:$0xff]
  %v12 = vld [vmem:[%s0 + $0x20] sm:$0xff]
  %v13 = vld [vmem:[%s0 + $0x28] sm:$0xf]
  %vm14 = vcmask 162816
  %v16 = vsel %vm14, %v8, 0
  %v19 = vsel %vm14, %v9, 0
  %v22 = vsel %vm14, %v10, 0
  %24 = vmatprep.subr.mxu0 0.0
  %25 = vmatpush1.xpose.msra.mxu0 0.0
  %26 = vmatprep.subr.mxu0 0.0
  %27 = vmatpush1.xpose.msra.mxu0 0.0
  %28 = vmatprep.subr.mxu0 0.0
  %29 = vmatpush1.xpose.msra.mxu0 0.0
  %30 = vmatprep.subr.mxu0 0.0
  %31 = vmatpush1.xpose.msra.mxu0 0.0
  %32 = vmatprep.subr.mxu0 0.0
  %33 = vmatpush1.xpose.msra.mxu0 0.0
  %34 = vmatprep.subr.mxu0 0.0
  %35 = vmatpush1.xpose.msra.mxu0 0.0
  %36 = vmatprep.subr.mxu0 0.0
  %37 = vmatpush1.xpose.msra.mxu0 0.0
  %38 = vmatprep.subr.mxu0 0.0
  %39 = vmatpush1.xpose.msra.mxu0 0.0
  %40 = vmatprep.subr.mxu0 0.0
  %41 = vmatpush1.xpose.msra.mxu0 0.0
  %42 = vmatprep.subr.mxu0 0.0
  %43 = vmatpush1.xpose.msra.mxu0 0.0
  %44 = vmatprep.subr.mxu0 0.0
  %45 = vmatpush1.xpose.msra.mxu0 0.0
  %46 = vmatprep.subr.mxu0 0.0
  %47 = vmatpush1.xpose.msra.mxu0 0.0
  %48 = vmatprep.subr.mxu0 0.0
  %49 = vmatpush1.xpose.msra.mxu0 0.0
  %50 = vmatprep.subr.mxu0 0.0
  %51 = vmatpush1.xpose.msra.mxu0 %v22
  %52 = vmatprep.subr.mxu0 0.0
  %53 = vmatpush1.xpose.msra.mxu0 %v19
  %54 = vmatprep.subr.mxu0 0.0
  %55 = vmatpush1.xpose.msra.mxu0 %v16
  %56 = vmatprep.subr.mxu0 0.0
  %57 = vmatpush2.xpose.msra.mxu0 0.0
  %58 = vmatprep.subr.mxu0 0.0
  %59 = vmatpush2.xpose.msra.mxu0 0.0
  %60 = vmatprep.subr.mxu0 0.0
  %61 = vmatpush2.xpose.msra.mxu0 0.0
  %62 = vmatprep.subr.mxu0 0.0
  %63 = vmatpush2.xpose.msra.mxu0 0.0
  %64 = vmatprep.subr.mxu0 0.0
  %65 = vmatpush2.xpose.msra.mxu0 0.0
  %66 = vmatprep.subr.mxu0 0.0
  %67 = vmatpush2.xpose.msra.mxu0 0.0
  %68 = vmatprep.subr.mxu0 0.0
  %69 = vmatpush2.xpose.msra.mxu0 0.0
  %70 = vmatprep.subr.mxu0 0.0
  %71 = vmatpush2.xpose.msra.mxu0 0.0
  %72 = vmatprep.subr.mxu0 0.0
  %73 = vmatpush2.xpose.msra.mxu0 0.0
  %74 = vmatprep.subr.mxu0 0.0
  %75 = vmatpush2.xpose.msra.mxu0 0.0
  %76 = vmatprep.subr.mxu0 0.0
  %77 = vmatpush2.xpose.msra.mxu0 0.0
  %78 = vmatprep.subr.mxu0 0.0
  %79 = vmatpush2.xpose.msra.mxu0 0.0
  %80 = vmatprep.subr.mxu0 0.0
  %81 = vmatpush2.xpose.msra.mxu0 0.0
  %82 = vmatprep.subr.mxu0 0.0
  %83 = vmatpush2.xpose.msra.mxu0 0.0
  %84 = vmatprep.subr.mxu0 0.0
  %85 = vmatpush2.xpose.msra.mxu0 0.0
  %86 = vmatprep.subr.mxu0 0.0
  %87 = vmatpush2.xpose.msra.mxu0 0.0
  %88 = vmatprep.mubr.f32.mxu0 0.0
  %89 = vmatmul.mubr.f32.gmra.mxu0 %v16
  %v90 = vpop.f32.mrf.mxu0
  %v91 = vadd.f32 0.0, %v90
  %v92 = vpop.f32.mrf.mxu0
  %93 = vmatprep.mubr.f32.mxu0 0.0
  %94 = vmatmul.mubr.f32.gmra.mxu0 %v19
  %v95 = vpop.f32.mrf.mxu0
  %v96 = vadd.f32 0.0, %v95
  %v97 = vpop.f32.mrf.mxu0
  %98 = vmatprep.mubr.f32.mxu0 0.0
  %99 = vmatmul.mubr.f32.gmra.mxu0 %v22
  %v100 = vpop.f32.mrf.mxu0
  %v101 = vadd.f32 0.0, %v100
  %v102 = vpop.f32.mrf.mxu0
  %103 = vdwg.mxu0
  %v105 = vsel %vm14, %v11, 0
  %v108 = vsel %vm14, %v12, 0
  %v111 = vsel %vm14, %v13, 0
  %113 = vmatprep.subr.mxu0 0.0
  %114 = vmatpush1.xpose.msra.mxu0 0.0
  %115 = vmatprep.subr.mxu0 0.0
  %116 = vmatpush1.xpose.msra.mxu0 0.0
  %117 = vmatprep.subr.mxu0 0.0
  %118 = vmatpush1.xpose.msra.mxu0 0.0
  %119 = vmatprep.subr.mxu0 0.0
  %120 = vmatpush1.xpose.msra.mxu0 0.0
  %121 = vmatprep.subr.mxu0 0.0
  %122 = vmatpush1.xpose.msra.mxu0 0.0
  %123 = vmatprep.subr.mxu0 0.0
  %124 = vmatpush1.xpose.msra.mxu0 0.0
  %125 = vmatprep.subr.mxu0 0.0
  %126 = vmatpush1.xpose.msra.mxu0 0.0
  %127 = vmatprep.subr.mxu0 0.0
  %128 = vmatpush1.xpose.msra.mxu0 0.0
  %129 = vmatprep.subr.mxu0 0.0
  %130 = vmatpush1.xpose.msra.mxu0 0.0
  %131 = vmatprep.subr.mxu0 0.0
  %132 = vmatpush1.xpose.msra.mxu0 0.0
  %133 = vmatprep.subr.mxu0 0.0
  %134 = vmatpush1.xpose.msra.mxu0 0.0
  %135 = vmatprep.subr.mxu0 0.0
  %136 = vmatpush1.xpose.msra.mxu0 0.0
  %137 = vmatprep.subr.mxu0 0.0
  %138 = vmatpush1.xpose.msra.mxu0 0.0
  %139 = vmatprep.subr.mxu0 0.0
  %140 = vmatpush1.xpose.msra.mxu0 %v111
  %141 = vmatprep.subr.mxu0 0.0
  %142 = vmatpush1.xpose.msra.mxu0 %v108
  %143 = vmatprep.subr.mxu0 0.0
  %144 = vmatpush1.xpose.msra.mxu0 %v105
  %145 = vmatprep.subr.mxu0 0.0
  %146 = vmatpush2.xpose.msra.mxu0 0.0
  %147 = vmatprep.subr.mxu0 0.0
  %148 = vmatpush2.xpose.msra.mxu0 0.0
  %149 = vmatprep.subr.mxu0 0.0
  %150 = vmatpush2.xpose.msra.mxu0 0.0
  %151 = vmatprep.subr.mxu0 0.0
  %152 = vmatpush2.xpose.msra.mxu0 0.0
  %153 = vmatprep.subr.mxu0 0.0
  %154 = vmatpush2.xpose.msra.mxu0 0.0
  %155 = vmatprep.subr.mxu0 0.0
  %156 = vmatpush2.xpose.msra.mxu0 0.0
  %157 = vmatprep.subr.mxu0 0.0
  %158 = vmatpush2.xpose.msra.mxu0 0.0
  %159 = vmatprep.subr.mxu0 0.0
  %160 = vmatpush2.xpose.msra.mxu0 0.0
  %161 = vmatprep.subr.mxu0 0.0
  %162 = vmatpush2.xpose.msra.mxu0 0.0
  %163 = vmatprep.subr.mxu0 0.0
  %164 = vmatpush2.xpose.msra.mxu0 0.0
  %165 = vmatprep.subr.mxu0 0.0
  %166 = vmatpush2.xpose.msra.mxu0 0.0
  %167 = vmatprep.subr.mxu0 0.0
  %168 = vmatpush2.xpose.msra.mxu0 0.0
  %169 = vmatprep.subr.mxu0 0.0
  %170 = vmatpush2.xpose.msra.mxu0 0.0
  %171 = vmatprep.subr.mxu0 0.0
  %172 = vmatpush2.xpose.msra.mxu0 0.0
  %173 = vmatprep.subr.mxu0 0.0
  %174 = vmatpush2.xpose.msra.mxu0 0.0
  %175 = vmatprep.subr.mxu0 0.0
  %176 = vmatpush2.xpose.msra.mxu0 0.0
  %177 = vmatprep.mubr.f32.mxu0 0.0
  %178 = vmatmul.mubr.f32.gmra.mxu0 %v105
  %v179 = vpop.f32.mrf.mxu0
  %v180 = vadd.f32 0.0, %v179
  %v181 = vpop.f32.mrf.mxu0
  %182 = vmatprep.mubr.f32.mxu0 0.0
  %183 = vmatmul.mubr.f32.gmra.mxu0 %v108
  %v184 = vpop.f32.mrf.mxu0
  %v185 = vadd.f32 0.0, %v184
  %v186 = vpop.f32.mrf.mxu0
  %187 = vmatprep.mubr.f32.mxu0 0.0
  %188 = vmatmul.mubr.f32.gmra.mxu0 %v111
  %v189 = vpop.f32.mrf.mxu0
  %v190 = vadd.f32 0.0, %v189
  %v191 = vpop.f32.mrf.mxu0
  %192 = vdwg.mxu0
  %193 = vst.msk [vmem:[%s1] sm:$0xff] %vm14, %v91
  %194 = vst.msk [vmem:[%s1 + $0x8] sm:$0xff] %vm14, %v96
  %vm195 = vcmask 158720
  %196 = vst.msk [vmem:[%s1 + $0x10] sm:$0xf] %vm195, %v101
  %197 = vst.msk [vmem:[%s1 + $0x18] sm:$0xff] %vm14, %v180
  %198 = vst.msk [vmem:[%s1 + $0x20] sm:$0xff] %vm14, %v185
  %199 = vst.msk [vmem:[%s1 + $0x28] sm:$0xf] %vm195, %v190
  // Predicated region
  $region6: #{vae_forward.13} parent=0 // pred_check
    _
  $region7: #{vae_forward.13} parent=0 // pred_check_branch
    %201 = sbr.rel (0) target = $region9
  $region8: #{vae_forward.13} parent=0 // pred_region
    _
  $region9: #{vae_forward.13} parent=0 // pred_fallthru
    _
  // Predicated region
  $region10: #{vae_forward.13} parent=0 // pred_check
    _
  $region11: #{vae_forward.13} parent=0 // pred_check_branch
    %203 = sbr.rel (0) target = $region13
  $region12: #{vae_forward.13} parent=0 // pred_region
    _
  $region13: #{vae_forward.13} parent=0 // pred_fallthru
    _

// kernel: vae_forward.14
$region0: #{vae_forward.14}
  #allocation0 [shape = 'u32[]', space=smem, size = 0x4, offset = 0x4, fixed_abs, tag = 'smem constant byte address 0x4 - core index']
  #allocation1 [shape = 'u32[144,128]{1,0:T(1,128)}', space=vmem, size = 0x12000, scoped, tag = 'internal scratch']
  %s0 = inlined_call_operand.vmem [shape: f32[2,20,20], index: 0, kind: input, shape index: {}]
  %s1 = inlined_call_operand.vmem [shape: f32[2,20], index: 1, kind: input, shape index: {}]
  %s2 = inlined_call_operand.vmem [shape: f32[1,20], index: 2, kind: input, shape index: {}]
  %s3 = inlined_call_operand.vmem [shape: f32[20,128], index: 3, kind: input, shape index: {}]
  %s4 = inlined_call_operand.vmem [shape: f32[1,128], index: 4, kind: input, shape index: {}]
  %s5 = inlined_call_operand.vmem [shape: f32[2,128], index: 5, kind: output, shape index: {}]
  %s6 = sld [smem:[#allocation0]]
  $region30: #{vae_forward.14} parent=0
    _
  %s8 = ssub.s32 1, %s6
  %s9 = scalar_select 0, %s8, %s6
  // Predicated region
  $region2: #{vae_forward.14} parent=0 // pred_check
    _
  $region3: #{vae_forward.14} parent=0 // pred_check_branch
    %11 = sbr.rel (0) target = $region5
  $region4: #{vae_forward.14} parent=0 // pred_region
    _
  $region5: #{vae_forward.14} parent=0 // pred_fallthru
    _
  // Predicated region
  $region6: #{vae_forward.14} parent=0 // pred_check
    _
  $region7: #{vae_forward.14} parent=0 // pred_check_branch
    %13 = sbr.rel (0) target = $region9
  $region8: #{vae_forward.14} parent=0 // pred_region
    _
  $region9: #{vae_forward.14} parent=0 // pred_fallthru
    _
  // Predicated region
  $region10: #{vae_forward.14} parent=0 // pred_check
    _
  $region11: #{vae_forward.14} parent=0 // pred_check_branch
    %15 = sbr.rel (0) target = $region13
  $region12: #{vae_forward.14} parent=0 // pred_region
    _
  $region13: #{vae_forward.14} parent=0 // pred_fallthru
    _
  // Predicated region
  $region14: #{vae_forward.14} parent=0 // pred_check
    _
  $region15: #{vae_forward.14} parent=0 // pred_check_branch
    %17 = sbr.rel (0) target = $region17
  $region16: #{vae_forward.14} parent=0 // pred_region
    _
  $region17: #{vae_forward.14} parent=0 // pred_fallthru
    _
  // Predicated region
  $region18: #{vae_forward.14} parent=0 // pred_check
    _
  $region19: #{vae_forward.14} parent=0 // pred_check_branch
    %19 = sbr.rel (0) target = $region21
  $region20: #{vae_forward.14} parent=0 // pred_region
    _
  $region21: #{vae_forward.14} parent=0 // pred_fallthru
    _
  %v20 = vlaneseq
  %v21 = vshrl.u32 %v20, 7
  %v22 = vadd.s32 %v21, 8
  %v23 = vadd.s32 %v21, 16
  %v24 = vlaneseq
  %v25 = vand.u32 %v24, 127
  %vm26 = vcmp.ge.s32.totalorder %v21, %v25
  %vm27 = vcmp.ge.s32.totalorder %v22, %v25
  %vm28 = vcmp.ge.s32.totalorder %v23, %v25
  %v29 = vld [vmem:[%s0] sm:$0xff]
  %v30 = vld [vmem:[%s0 + $0x8] sm:$0xff]
  %v31 = vld [vmem:[%s0 + $0x10] sm:$0xf]
  %v32 = vld [vmem:[%s0 + $0x18] sm:$0xff]
  %v33 = vld [vmem:[%s0 + $0x20] sm:$0xff]
  %v34 = vld [vmem:[%s0 + $0x28] sm:$0xf]
  %v35 = vsel %vm26, 1, 0
  %v36 = vsel %vm27, 1, 0
  %v37 = vsel %vm28, 1, 0
  %vm38 = vcmp.eq.s32.totalorder %v35, 1
  %vm39 = vcmp.eq.s32.totalorder %v36, 1
  %vm40 = vcmp.eq.s32.totalorder %v37, 1
  %v41 = vsel %vm38, %v29, 0.0
  %v42 = vsel %vm39, %v30, 0.0
  %v43 = vsel %vm40, %v31, 0.0
  %v44 = vsel %vm38, %v32, 0.0
  %v45 = vsel %vm39, %v33, 0.0
  %v46 = vsel %vm40, %v34, 0.0
  %v47 = vld [vmem:[%s1] sm:$0x3]
  %v48 = vld [vmem:[%s2] sm:$0x1]
  %v50 = vlaneseq
  %v51 = vshrl.u32 %v50, 7
  %v52 = vsub.s32 0, %v51
  %v53 = vrot.slane %v48, %v52
  %v55 = vmul.f32 %v41, %v53
  %v56 = vmul.f32 %v42, %v53
  %v57 = vmul.f32 %v43, %v53
  %v58 = vmul.f32 %v44, %v53
  %v59 = vmul.f32 %v45, %v53
  %v60 = vmul.f32 %v46, %v53
  %vm61 = vcmask 162816
  %v62 = vsel %vm61, %v55, 0.0
  %63 = vadd.xlane.f32.xlu0 %v62
  %v64 = vpop.xlane.xlu0 %63
  %v65 = vsel %vm61, %v56, 0.0
  %66 = vadd.xlane.f32.xlu0 %v65
  %v67 = vpop.xlane.xlu0 %66
  %vm68 = vcmask 158720
  %v69 = vsel %vm68, %v57, 0.0
  %70 = vadd.xlane.f32.xlu0 %v69
  %v71 = vpop.xlane.xlu0 %70
  %v72 = vsel %vm61, %v58, 0.0
  %73 = vadd.xlane.f32.xlu0 %v72
  %v74 = vpop.xlane.xlu0 %73
  %v75 = vsel %vm61, %v59, 0.0
  %76 = vadd.xlane.f32.xlu0 %v75
  %v77 = vpop.xlane.xlu0 %76
  %v78 = vsel %vm68, %v60, 0.0
  %79 = vadd.xlane.f32.xlu0 %v78
  %v80 = vpop.xlane.xlu0 %79
  %v87 = vlaneseq
  %v88 = vshrl.u32 %v87, 7
  %v89 = vsub.s32 %v25, %v88
  %v90 = vrot.slane %v64, %v89
  %v91 = vadd.s32 %v25, 4294967288
  %v92 = vlaneseq
  %v93 = vshrl.u32 %v92, 7
  %v94 = vsub.s32 %v91, %v93
  %v95 = vrot.slane %v67, %v94
  %vm96 = vcmask 130112
  %v97 = vsel %vm96, %v95, %v90
  %v98 = vadd.s32 %v25, 4294967280
  %v99 = vlaneseq
  %v100 = vshrl.u32 %v99, 7
  %v101 = vsub.s32 %v98, %v100
  %v102 = vrot.slane %v71, %v101
  %vm103 = vcmask 195712
  %v104 = vsel %vm103, %v102, %v97
  %v105 = vlaneseq
  %v106 = vshrl.u32 %v105, 7
  %v107 = vsub.s32 %v25, %v106
  %v108 = vrot.slane %v74, %v107
  %v109 = vlaneseq
  %v110 = vshrl.u32 %v109, 7
  %v111 = vsub.s32 %v91, %v110
  %v112 = vrot.slane %v77, %v111
  %v113 = vsel %vm96, %v112, %v108
  %v114 = vlaneseq
  %v115 = vshrl.u32 %v114, 7
  %v116 = vsub.s32 %v98, %v115
  %v117 = vrot.slane %v80, %v116
  %v118 = vsel %vm103, %v117, %v113
  %vm119 = vcmask 1041409
  %v120 = vsel %vm119, %v118, %v104
  %v122 = vadd.f32 %v47, %v120
  %v123 = vld [vmem:[%s3] sm:$0xff]
  %v124 = vld [vmem:[%s3 + $0x8] sm:$0xff]
  %v125 = vld [vmem:[%s3 + $0x10] sm:$0xf]
  %v126 = vld [vmem:[%s4] sm:$0x1]
  %v128 = vlaneseq
  %v129 = vshrl.u32 %v128, 7
  %v130 = vsub.s32 0, %v129
  %v131 = vrot.slane %v126, %v130
  %v134 = vsel %vm61, %v122, 0
  %vm136 = vcmask 1043456
  %v138 = vsel %vm136, %v125, 0
  %140 = vmatprep.subr.mxu0 0.0
  %141 = vmatpush1.msra.mxu0 0.0
  %142 = vmatprep.subr.mxu0 0.0
  %143 = vmatpush1.msra.mxu0 0.0
  %144 = vmatprep.subr.mxu0 0.0
  %145 = vmatpush1.msra.mxu0 0.0
  %146 = vmatprep.subr.mxu0 0.0
  %147 = vmatpush1.msra.mxu0 0.0
  %148 = vmatprep.subr.mxu0 0.0
  %149 = vmatpush1.msra.mxu0 0.0
  %150 = vmatprep.subr.mxu0 0.0
  %151 = vmatpush1.msra.mxu0 0.0
  %152 = vmatprep.subr.mxu0 0.0
  %153 = vmatpush1.msra.mxu0 0.0
  %154 = vmatprep.subr.mxu0 0.0
  %155 = vmatpush1.msra.mxu0 0.0
  %156 = vmatprep.subr.mxu0 0.0
  %157 = vmatpush1.msra.mxu0 0.0
  %158 = vmatprep.subr.mxu0 0.0
  %159 = vmatpush1.msra.mxu0 0.0
  %160 = vmatprep.subr.mxu0 0.0
  %161 = vmatpush1.msra.mxu0 0.0
  %162 = vmatprep.subr.mxu0 0.0
  %163 = vmatpush1.msra.mxu0 0.0
  %164 = vmatprep.subr.mxu0 0.0
  %165 = vmatpush1.msra.mxu0 0.0
  %166 = vmatprep.subr.mxu0 0.0
  %167 = vmatpush1.msra.mxu0 %v138
  %168 = vmatprep.subr.mxu0 0.0
  %169 = vmatpush1.msra.mxu0 %v124
  %170 = vmatprep.subr.mxu0 0.0
  %171 = vmatpush1.msra.mxu0 %v123
  %172 = vmatprep.subr.mxu0 0.0
  %173 = vmatpush2.msra.mxu0 0.0
  %174 = vmatprep.subr.mxu0 0.0
  %175 = vmatpush2.msra.mxu0 0.0
  %176 = vmatprep.subr.mxu0 0.0
  %177 = vmatpush2.msra.mxu0 0.0
  %178 = vmatprep.subr.mxu0 0.0
  %179 = vmatpush2.msra.mxu0 0.0
  %180 = vmatprep.subr.mxu0 0.0
  %181 = vmatpush2.msra.mxu0 0.0
  %182 = vmatprep.subr.mxu0 0.0
  %183 = vmatpush2.msra.mxu0 0.0
  %184 = vmatprep.subr.mxu0 0.0
  %185 = vmatpush2.msra.mxu0 0.0
  %186 = vmatprep.subr.mxu0 0.0
  %187 = vmatpush2.msra.mxu0 0.0
  %188 = vmatprep.subr.mxu0 0.0
  %189 = vmatpush2.msra.mxu0 0.0
  %190 = vmatprep.subr.mxu0 0.0
  %191 = vmatpush2.msra.mxu0 0.0
  %192 = vmatprep.subr.mxu0 0.0
  %193 = vmatpush2.msra.mxu0 0.0
  %194 = vmatprep.subr.mxu0 0.0
  %195 = vmatpush2.msra.mxu0 0.0
  %196 = vmatprep.subr.mxu0 0.0
  %197 = vmatpush2.msra.mxu0 0.0
  %198 = vmatprep.subr.mxu0 0.0
  %199 = vmatpush2.msra.mxu0 0.0
  %200 = vmatprep.subr.mxu0 0.0
  %201 = vmatpush2.msra.mxu0 0.0
  %202 = vmatprep.subr.mxu0 0.0
  %203 = vmatpush2.msra.mxu0 0.0
  %204 = vmatprep.mubr.f32.mxu0 0.0
  %205 = vmatmul.mubr.f32.gmra.mxu0 %v134
  %v206 = vpop.f32.mrf.mxu0
  %v207 = vadd.f32 %v131, %v206
  %v208 = vpop.f32.mrf.mxu0
  %209 = vdwg.mxu0
  %210 = vst [vmem:[%s5] sm:$0x3] %v207
  // Predicated region
  $region22: #{vae_forward.14} parent=0 // pred_check
    _
  $region23: #{vae_forward.14} parent=0 // pred_check_branch
    %212 = sbr.rel (0) target = $region25
  $region24: #{vae_forward.14} parent=0 // pred_region
    _
  $region25: #{vae_forward.14} parent=0 // pred_fallthru
    _
  // Predicated region
  $region26: #{vae_forward.14} parent=0 // pred_check
    _
  $region27: #{vae_forward.14} parent=0 // pred_check_branch
    %214 = sbr.rel (0) target = $region29
  $region28: #{vae_forward.14} parent=0 // pred_region
    _
  $region29: #{vae_forward.14} parent=0 // pred_fallthru
    _

// kernel: vae_forward.15
$region0: #{vae_forward.15}
  #allocation0 [shape = 'u32[]', space=smem, size = 0x4, offset = 0x4, fixed_abs, tag = 'smem constant byte address 0x4 - core index']
  #allocation1 [shape = 'u32[144,128]{1,0:T(1,128)}', space=vmem, size = 0x12000, scoped, tag = 'internal scratch']
  %s0 = inlined_call_operand.vmem [shape: f32[8,144], index: 0, kind: input, shape index: {}]
  %s1 = inlined_call_operand.vmem [shape: f32[144,128], index: 1, kind: input, shape index: {}]
  %s2 = inlined_call_operand.vmem [shape: f32[1,128], index: 2, kind: input, shape index: {}]
  %s3 = inlined_call_operand.vmem [shape: f32[1,32], index: 3, kind: input, shape index: {}]
  %s4 = inlined_call_operand.vmem [shape: f32[1,32], index: 4, kind: input, shape index: {}]
  %s5 = inlined_call_operand.vmem [shape: f32[8,128], index: 5, kind: output, shape index: {}]
  %s6 = sld [smem:[#allocation0]]
  $region30: #{vae_forward.15} parent=0
    _
  %s8 = ssub.s32 1, %s6
  %s9 = scalar_select 0, %s8, %s6
  // Predicated region
  $region2: #{vae_forward.15} parent=0 // pred_check
    _
  $region3: #{vae_forward.15} parent=0 // pred_check_branch
    %11 = sbr.rel (0) target = $region5
  $region4: #{vae_forward.15} parent=0 // pred_region
    _
  $region5: #{vae_forward.15} parent=0 // pred_fallthru
    _
  // Predicated region
  $region6: #{vae_forward.15} parent=0 // pred_check
    _
  $region7: #{vae_forward.15} parent=0 // pred_check_branch
    %13 = sbr.rel (0) target = $region9
  $region8: #{vae_forward.15} parent=0 // pred_region
    _
  $region9: #{vae_forward.15} parent=0 // pred_fallthru
    _
  // Predicated region
  $region10: #{vae_forward.15} parent=0 // pred_check
    _
  $region11: #{vae_forward.15} parent=0 // pred_check_branch
    %15 = sbr.rel (0) target = $region13
  $region12: #{vae_forward.15} parent=0 // pred_region
    _
  $region13: #{vae_forward.15} parent=0 // pred_fallthru
    _
  // Predicated region
  $region14: #{vae_forward.15} parent=0 // pred_check
    _
  $region15: #{vae_forward.15} parent=0 // pred_check_branch
    %17 = sbr.rel (0) target = $region17
  $region16: #{vae_forward.15} parent=0 // pred_region
    _
  $region17: #{vae_forward.15} parent=0 // pred_fallthru
    _
  // Predicated region
  $region18: #{vae_forward.15} parent=0 // pred_check
    _
  $region19: #{vae_forward.15} parent=0 // pred_check_branch
    %19 = sbr.rel (0) target = $region21
  $region20: #{vae_forward.15} parent=0 // pred_region
    _
  $region21: #{vae_forward.15} parent=0 // pred_fallthru
    _
  %v20 = vld [vmem:[%s0] sm:$0xff]
  %v21 = vld [vmem:[%s0 + $0x8] sm:$0xff]
  %v22 = vld [vmem:[%s1] sm:$0xff]
  %v23 = vld [vmem:[%s1 + $0x8] sm:$0xff]
  %v24 = vld [vmem:[%s1 + $0x10] sm:$0xff]
  %v25 = vld [vmem:[%s1 + $0x18] sm:$0xff]
  %v26 = vld [vmem:[%s1 + $0x20] sm:$0xff]
  %v27 = vld [vmem:[%s1 + $0x28] sm:$0xff]
  %v28 = vld [vmem:[%s1 + $0x30] sm:$0xff]
  %v29 = vld [vmem:[%s1 + $0x38] sm:$0xff]
  %v30 = vld [vmem:[%s1 + $0x40] sm:$0xff]
  %v31 = vld [vmem:[%s1 + $0x48] sm:$0xff]
  %v32 = vld [vmem:[%s1 + $0x50] sm:$0xff]
  %v33 = vld [vmem:[%s1 + $0x58] sm:$0xff]
  %v34 = vld [vmem:[%s1 + $0x60] sm:$0xff]
  %v35 = vld [vmem:[%s1 + $0x68] sm:$0xff]
  %v36 = vld [vmem:[%s1 + $0x70] sm:$0xff]
  %v37 = vld [vmem:[%s1 + $0x78] sm:$0xff]
  %v38 = vld [vmem:[%s1 + $0x80] sm:$0xff]
  %v39 = vld [vmem:[%s1 + $0x88] sm:$0xff]
  %v40 = vld [vmem:[%s2] sm:$0x1]
  %v42 = vlaneseq
  %v43 = vshrl.u32 %v42, 7
  %v44 = vsub.s32 0, %v43
  %v45 = vrot.slane %v40, %v44
  %vm47 = vcmask 130048
  %v49 = vsel %vm47, %v21, 0
  %51 = vmatprep.subr.mxu0 0.0
  %52 = vmatpush1.msra.mxu0 %v37
  %53 = vmatprep.subr.mxu0 0.0
  %54 = vmatpush1.msra.mxu0 %v36
  %55 = vmatprep.subr.mxu0 0.0
  %56 = vmatpush1.msra.mxu0 %v35
  %57 = vmatprep.subr.mxu0 0.0
  %58 = vmatpush1.msra.mxu0 %v34
  %59 = vmatprep.subr.mxu0 0.0
  %60 = vmatpush1.msra.mxu0 %v33
  %61 = vmatprep.subr.mxu0 0.0
  %62 = vmatpush1.msra.mxu0 %v32
  %63 = vmatprep.subr.mxu0 0.0
  %64 = vmatpush1.msra.mxu0 %v31
  %65 = vmatprep.subr.mxu0 0.0
  %66 = vmatpush1.msra.mxu0 %v30
  %67 = vmatprep.subr.mxu0 0.0
  %68 = vmatpush1.msra.mxu0 %v29
  %69 = vmatprep.subr.mxu0 0.0
  %70 = vmatpush1.msra.mxu0 %v28
  %71 = vmatprep.subr.mxu0 0.0
  %72 = vmatpush1.msra.mxu0 %v27
  %73 = vmatprep.subr.mxu0 0.0
  %74 = vmatpush1.msra.mxu0 %v26
  %75 = vmatprep.subr.mxu0 0.0
  %76 = vmatpush1.msra.mxu0 %v25
  %77 = vmatprep.subr.mxu0 0.0
  %78 = vmatpush1.msra.mxu0 %v24
  %79 = vmatprep.subr.mxu0 0.0
  %80 = vmatpush1.msra.mxu0 %v23
  %81 = vmatprep.subr.mxu0 0.0
  %82 = vmatpush1.msra.mxu0 %v22
  %83 = vmatprep.subr.mxu0 0.0
  %84 = vmatpush2.msra.mxu0 0.0
  %85 = vmatprep.subr.mxu0 0.0
  %86 = vmatpush2.msra.mxu0 0.0
  %87 = vmatprep.subr.mxu0 0.0
  %88 = vmatpush2.msra.mxu0 0.0
  %89 = vmatprep.subr.mxu0 0.0
  %90 = vmatpush2.msra.mxu0 0.0
  %91 = vmatprep.subr.mxu0 0.0
  %92 = vmatpush2.msra.mxu0 0.0
  %93 = vmatprep.subr.mxu0 0.0
  %94 = vmatpush2.msra.mxu0 0.0
  %95 = vmatprep.subr.mxu0 0.0
  %96 = vmatpush2.msra.mxu0 0.0
  %97 = vmatprep.subr.mxu0 0.0
  %98 = vmatpush2.msra.mxu0 0.0
  %99 = vmatprep.subr.mxu0 0.0
  %100 = vmatpush2.msra.mxu0 0.0
  %101 = vmatprep.subr.mxu0 0.0
  %102 = vmatpush2.msra.mxu0 0.0
  %103 = vmatprep.subr.mxu0 0.0
  %104 = vmatpush2.msra.mxu0 0.0
  %105 = vmatprep.subr.mxu0 0.0
  %106 = vmatpush2.msra.mxu0 0.0
  %107 = vmatprep.subr.mxu0 0.0
  %108 = vmatpush2.msra.mxu0 0.0
  %109 = vmatprep.subr.mxu0 0.0
  %110 = vmatpush2.msra.mxu0 0.0
  %111 = vmatprep.subr.mxu0 0.0
  %112 = vmatpush2.msra.mxu0 %v39
  %113 = vmatprep.subr.mxu0 0.0
  %114 = vmatpush2.msra.mxu0 %v38
  %115 = vmatprep.mubr.f32.mxu0 %v49
  %116 = vmatmul.mubr.f32.gmra.mxu0 %v20
  %v117 = vpop.f32.mrf.mxu0
  %v118 = vadd.f32 %v45, %v117
  %v119 = vpop.f32.mrf.mxu0
  %120 = vdwg.mxu0
  %v121 = vrot.slane %v118, 4
  %v122 = vadd.f32 %v118, %v121
  %v123 = vrot.slane %v122, 2
  %v124 = vadd.f32 %v122, %v123
  %v125 = vrot.slane %v124, 1
  %v126 = vadd.f32 %v124, %v125
  %128 = vrot.lane.b32.xlu0 %v126, 96
  %v129 = vpop.permute.xlu0 %128
  %v131 = vadd.f32 %v126, %v129
  %132 = vrot.lane.b32.xlu0 %v126, 64
  %v133 = vpop.permute.xlu0 %132
  %v135 = vadd.f32 %v131, %v133
  %136 = vrot.lane.b32.xlu0 %v126, 32
  %v137 = vpop.permute.xlu0 %136
  %v139 = vadd.f32 %v135, %v137
  %v140 = vmul.f32 %v139, 0.03125
  %142 = vrot.lane.b32.xlu0 %v140, 32
  %v143 = vpop.permute.xlu0 %142
  %145 = vrot.lane.b32.xlu0 %v140, 64
  %v146 = vpop.permute.xlu0 %145
  %148 = vrot.lane.b32.xlu0 %v140, 96
  %v149 = vpop.permute.xlu0 %148
  %vm151 = vcmask 261120
  %v152 = vsel %vm151, %v140, %v143
  %vm153 = vcmask 523264
  %v154 = vsel %vm153, %v152, %v146
  %vm155 = vcmask 785408
  %v156 = vsel %vm155, %v154, %v149
  %v157 = vlaneseq
  %v158 = vshrl.u32 %v157, 7
  %v159 = vsub.s32 0, %v158
  %v160 = vrot.slane %v156, %v159
  %v161 = vsub.f32 %v118, %v160
  %v162 = vmul.f32 %v161, %v161
  %v163 = vrot.slane %v162, 4
  %v164 = vadd.f32 %v162, %v163
  %v165 = vrot.slane %v164, 2
  %v166 = vadd.f32 %v164, %v165
  %v167 = vrot.slane %v166, 1
  %v168 = vadd.f32 %v166, %v167
  %170 = vrot.lane.b32.xlu0 %v168, 96
  %v171 = vpop.permute.xlu0 %170
  %v173 = vadd.f32 %v168, %v171
  %174 = vrot.lane.b32.xlu0 %v168, 64
  %v175 = vpop.permute.xlu0 %174
  %v177 = vadd.f32 %v173, %v175
  %178 = vrot.lane.b32.xlu0 %v168, 32
  %v179 = vpop.permute.xlu0 %178
  %v181 = vadd.f32 %v177, %v179
  %v182 = vmul.f32 %v181, 0.03125
  %v183 = vld [vmem:[%s3] sm:$0x1]
  %v184 = vadd.f32 %v182, 1e-05
  %v185 = vrsqrt.pop %v184
  %v186 = vmul.f32 %v183, %v185
  %v188 = vlaneseq
  %v189 = vshrl.u32 %v188, 7
  %v190 = vsub.s32 0, %v189
  %v191 = vrot.slane %v186, %v190
  %192 = vrot.lane.b32.xlu0 %v191, 32
  %v193 = vpop.permute.xlu0 %192
  %195 = vrot.lane.b32.xlu0 %v191, 64
  %v196 = vpop.permute.xlu0 %195
  %198 = vrot.lane.b32.xlu0 %v191, 96
  %v199 = vpop.permute.xlu0 %198
  %v201 = vsel %vm151, %v186, %v193
  %v202 = vsel %vm153, %v201, %v196
  %v203 = vsel %vm155, %v202, %v199
  %v204 = vld [vmem:[%s4] sm:$0x1]
  %v206 = vlaneseq
  %v207 = vshrl.u32 %v206, 7
  %v208 = vsub.s32 0, %v207
  %v209 = vrot.slane %v204, %v208
  %210 = vrot.lane.b32.xlu0 %v209, 32
  %v211 = vpop.permute.xlu0 %210
  %213 = vrot.lane.b32.xlu0 %v209, 64
  %v214 = vpop.permute.xlu0 %213
  %216 = vrot.lane.b32.xlu0 %v209, 96
  %v217 = vpop.permute.xlu0 %216
  %v219 = vsel %vm151, %v204, %v211
  %v220 = vsel %vm153, %v219, %v214
  %v221 = vsel %vm155, %v220, %v217
  %v222 = vlaneseq
  %v223 = vshrl.u32 %v222, 7
  %v224 = vsub.s32 0, %v223
  %v225 = vrot.slane %v203, %v224
  %v226 = vmul.f32 %v161, %v225
  %v227 = vlaneseq
  %v228 = vshrl.u32 %v227, 7
  %v229 = vsub.s32 0, %v228
  %v230 = vrot.slane %v221, %v229
  %v231 = vadd.f32 %v226, %v230
  %v232 = vmax.f32 %v231, 0.0
  %233 = vst [vmem:[%s5] sm:$0xff] %v232
  // Predicated region
  $region22: #{vae_forward.15} parent=0 // pred_check
    _
  $region23: #{vae_forward.15} parent=0 // pred_check_branch
    %235 = sbr.rel (0) target = $region25
  $region24: #{vae_forward.15} parent=0 // pred_region
    _
  $region25: #{vae_forward.15} parent=0 // pred_fallthru
    _
  // Predicated region
  $region26: #{vae_forward.15} parent=0 // pred_check
    _
  $region27: #{vae_forward.15} parent=0 // pred_check_branch
    %237 = sbr.rel (0) target = $region29
  $region28: #{vae_forward.15} parent=0 // pred_region
    _
  $region29: #{vae_forward.15} parent=0 // pred_fallthru
    _

// kernel: vae_forward.16
$region0: #{vae_forward.16}
  #allocation0 [shape = 'u32[]', space=smem, size = 0x4, offset = 0x4, fixed_abs, tag = 'smem constant byte address 0x4 - core index']
  #allocation1 [shape = 'u32[144,128]{1,0:T(1,128)}', space=vmem, size = 0x12000, scoped, tag = 'internal scratch']
  %s0 = inlined_call_operand.vmem [shape: f32[32,72], index: 0, kind: input, shape index: {}]
  %s1 = inlined_call_operand.vmem [shape: f32[72,128], index: 1, kind: input, shape index: {}]
  %s2 = inlined_call_operand.vmem [shape: f32[1,128], index: 2, kind: input, shape index: {}]
  %s3 = inlined_call_operand.vmem [shape: f32[1,32], index: 3, kind: input, shape index: {}]
  %s4 = inlined_call_operand.vmem [shape: f32[1,32], index: 4, kind: input, shape index: {}]
  %s5 = inlined_call_operand.vmem [shape: f32[32,128], index: 5, kind: output, shape index: {}]
  %s6 = sld [smem:[#allocation0]]
  $region30: #{vae_forward.16} parent=0
    _
  %s8 = ssub.s32 1, %s6
  %s9 = scalar_select 0, %s8, %s6
  // Predicated region
  $region2: #{vae_forward.16} parent=0 // pred_check
    _
  $region3: #{vae_forward.16} parent=0 // pred_check_branch
    %11 = sbr.rel (0) target = $region5
  $region4: #{vae_forward.16} parent=0 // pred_region
    _
  $region5: #{vae_forward.16} parent=0 // pred_fallthru
    _
  // Predicated region
  $region6: #{vae_forward.16} parent=0 // pred_check
    _
  $region7: #{vae_forward.16} parent=0 // pred_check_branch
    %13 = sbr.rel (0) target = $region9
  $region8: #{vae_forward.16} parent=0 // pred_region
    _
  $region9: #{vae_forward.16} parent=0 // pred_fallthru
    _
  // Predicated region
  $region10: #{vae_forward.16} parent=0 // pred_check
    _
  $region11: #{vae_forward.16} parent=0 // pred_check_branch
    %15 = sbr.rel (0) target = $region13
  $region12: #{vae_forward.16} parent=0 // pred_region
    _
  $region13: #{vae_forward.16} parent=0 // pred_fallthru
    _
  // Predicated region
  $region14: #{vae_forward.16} parent=0 // pred_check
    _
  $region15: #{vae_forward.16} parent=0 // pred_check_branch
    %17 = sbr.rel (0) target = $region17
  $region16: #{vae_forward.16} parent=0 // pred_region
    _
  $region17: #{vae_forward.16} parent=0 // pred_fallthru
    _
  // Predicated region
  $region18: #{vae_forward.16} parent=0 // pred_check
    _
  $region19: #{vae_forward.16} parent=0 // pred_check_branch
    %19 = sbr.rel (0) target = $region21
  $region20: #{vae_forward.16} parent=0 // pred_region
    _
  $region21: #{vae_forward.16} parent=0 // pred_fallthru
    _
  %v20 = vld [vmem:[%s0] sm:$0xff]
  %v21 = vld [vmem:[%s0 + $0x8] sm:$0xff]
  %v22 = vld [vmem:[%s0 + $0x10] sm:$0xff]
  %v23 = vld [vmem:[%s0 + $0x18] sm:$0xff]
  %v24 = vld [vmem:[%s1] sm:$0xff]
  %v25 = vld [vmem:[%s1 + $0x8] sm:$0xff]
  %v26 = vld [vmem:[%s1 + $0x10] sm:$0xff]
  %v27 = vld [vmem:[%s1 + $0x18] sm:$0xff]
  %v28 = vld [vmem:[%s1 + $0x20] sm:$0xff]
  %v29 = vld [vmem:[%s1 + $0x28] sm:$0xff]
  %v30 = vld [vmem:[%s1 + $0x30] sm:$0xff]
  %v31 = vld [vmem:[%s1 + $0x38] sm:$0xff]
  %v32 = vld [vmem:[%s1 + $0x40] sm:$0xff]
  %v33 = vld [vmem:[%s2] sm:$0x1]
  %v35 = vlaneseq
  %v36 = vshrl.u32 %v35, 7
  %v37 = vsub.s32 0, %v36
  %v38 = vrot.slane %v33, %v37
  %vm40 = vcmask 588800
  %v42 = vsel %vm40, %v20, 0
  %v45 = vsel %vm40, %v21, 0
  %v48 = vsel %vm40, %v22, 0
  %v51 = vsel %vm40, %v23, 0
  %53 = vmatprep.subr.mxu0 0.0
  %54 = vmatpush1.msra.mxu0 0.0
  %55 = vmatprep.subr.mxu0 0.0
  %56 = vmatpush1.msra.mxu0 0.0
  %57 = vmatprep.subr.mxu0 0.0
  %58 = vmatpush1.msra.mxu0 0.0
  %59 = vmatprep.subr.mxu0 0.0
  %60 = vmatpush1.msra.mxu0 0.0
  %61 = vmatprep.subr.mxu0 0.0
  %62 = vmatpush1.msra.mxu0 0.0
  %63 = vmatprep.subr.mxu0 0.0
  %64 = vmatpush1.msra.mxu0 0.0
  %65 = vmatprep.subr.mxu0 0.0
  %66 = vmatpush1.msra.mxu0 0.0
  %67 = vmatprep.subr.mxu0 0.0
  %68 = vmatpush1.msra.mxu0 %v32
  %69 = vmatprep.subr.mxu0 0.0
  %70 = vmatpush1.msra.mxu0 %v31
  %71 = vmatprep.subr.mxu0 0.0
  %72 = vmatpush1.msra.mxu0 %v30
  %73 = vmatprep.subr.mxu0 0.0
  %74 = vmatpush1.msra.mxu0 %v29
  %75 = vmatprep.subr.mxu0 0.0
  %76 = vmatpush1.msra.mxu0 %v28
  %77 = vmatprep.subr.mxu0 0.0
  %78 = vmatpush1.msra.mxu0 %v27
  %79 = vmatprep.subr.mxu0 0.0
  %80 = vmatpush1.msra.mxu0 %v26
  %81 = vmatprep.subr.mxu0 0.0
  %82 = vmatpush1.msra.mxu0 %v25
  %83 = vmatprep.subr.mxu0 0.0
  %84 = vmatpush1.msra.mxu0 %v24
  %85 = vmatprep.subr.mxu0 0.0
  %86 = vmatpush2.msra.mxu0 0.0
  %87 = vmatprep.subr.mxu0 0.0
  %88 = vmatpush2.msra.mxu0 0.0
  %89 = vmatprep.subr.mxu0 0.0
  %90 = vmatpush2.msra.mxu0 0.0
  %91 = vmatprep.subr.mxu0 0.0
  %92 = vmatpush2.msra.mxu0 0.0
  %93 = vmatprep.subr.mxu0 0.0
  %94 = vmatpush2.msra.mxu0 0.0
  %95 = vmatprep.subr.mxu0 0.0
  %96 = vmatpush2.msra.mxu0 0.0
  %97 = vmatprep.subr.mxu0 0.0
  %98 = vmatpush2.msra.mxu0 0.0
  %99 = vmatprep.subr.mxu0 0.0
  %100 = vmatpush2.msra.mxu0 0.0
  %101 = vmatprep.subr.mxu0 0.0
  %102 = vmatpush2.msra.mxu0 0.0
  %103 = vmatprep.subr.mxu0 0.0
  %104 = vmatpush2.msra.mxu0 0.0
  %105 = vmatprep.subr.mxu0 0.0
  %106 = vmatpush2.msra.mxu0 0.0
  %107 = vmatprep.subr.mxu0 0.0
  %108 = vmatpush2.msra.mxu0 0.0
  %109 = vmatprep.subr.mxu0 0.0
  %110 = vmatpush2.msra.mxu0 0.0
  %111 = vmatprep.subr.mxu0 0.0
  %112 = vmatpush2.msra.mxu0 0.0
  %113 = vmatprep.subr.mxu0 0.0
  %114 = vmatpush2.msra.mxu0 0.0
  %115 = vmatprep.subr.mxu0 0.0
  %116 = vmatpush2.msra.mxu0 0.0
  %117 = vmatprep.mubr.f32.mxu0 0.0
  %118 = vmatmul.mubr.f32.gmra.mxu0 %v42
  %v119 = vpop.f32.mrf.mxu0
  %v120 = vadd.f32 %v38, %v119
  %v121 = vpop.f32.mrf.mxu0
  %122 = vmatprep.mubr.f32.mxu0 0.0
  %123 = vmatmul.mubr.f32.gmra.mxu0 %v45
  %v124 = vpop.f32.mrf.mxu0
  %v125 = vadd.f32 %v38, %v124
  %v126 = vpop.f32.mrf.mxu0
  %127 = vmatprep.mubr.f32.mxu0 0.0
  %128 = vmatmul.mubr.f32.gmra.mxu0 %v48
  %v129 = vpop.f32.mrf.mxu0
  %v130 = vadd.f32 %v38, %v129
  %v131 = vpop.f32.mrf.mxu0
  %132 = vmatprep.mubr.f32.mxu0 0.0
  %133 = vmatmul.mubr.f32.gmra.mxu0 %v51
  %v134 = vpop.f32.mrf.mxu0
  %v135 = vadd.f32 %v38, %v134
  %v136 = vpop.f32.mrf.mxu0
  %137 = vdwg.mxu0
  %v138 = vadd.f32 %v120, %v125
  %v139 = vadd.f32 %v138, %v130
  %v140 = vadd.f32 %v139, %v135
  %v141 = vrot.slane %v140, 4
  %v142 = vadd.f32 %v140, %v141
  %v143 = vrot.slane %v142, 2
  %v144 = vadd.f32 %v142, %v143
  %v145 = vrot.slane %v144, 1
  %v146 = vadd.f32 %v144, %v145
  %148 = vrot.lane.b32.xlu0 %v146, 96
  %v149 = vpop.permute.xlu0 %148
  %v151 = vadd.f32 %v146, %v149
  %152 = vrot.lane.b32.xlu0 %v146, 64
  %v153 = vpop.permute.xlu0 %152
  %v155 = vadd.f32 %v151, %v153
  %156 = vrot.lane.b32.xlu0 %v146, 32
  %v157 = vpop.permute.xlu0 %156
  %v159 = vadd.f32 %v155, %v157
  %v160 = vmul.f32 %v159, 0.0078125
  %162 = vrot.lane.b32.xlu0 %v160, 32
  %v163 = vpop.permute.xlu0 %162
  %165 = vrot.lane.b32.xlu0 %v160, 64
  %v166 = vpop.permute.xlu0 %165
  %168 = vrot.lane.b32.xlu0 %v160, 96
  %v169 = vpop.permute.xlu0 %168
  %vm171 = vcmask 261120
  %v172 = vsel %vm171, %v160, %v163
  %vm173 = vcmask 523264
  %v174 = vsel %vm173, %v172, %v166
  %vm175 = vcmask 785408
  %v176 = vsel %vm175, %v174, %v169
  %v177 = vlaneseq
  %v178 = vshrl.u32 %v177, 7
  %v179 = vsub.s32 0, %v178
  %v180 = vrot.slane %v176, %v179
  %v181 = vsub.f32 %v120, %v180
  %v182 = vsub.f32 %v125, %v180
  %v183 = vsub.f32 %v130, %v180
  %v184 = vsub.f32 %v135, %v180
  %v185 = vmul.f32 %v181, %v181
  %v186 = vmul.f32 %v182, %v182
  %v187 = vmul.f32 %v183, %v183
  %v188 = vmul.f32 %v184, %v184
  %v189 = vadd.f32 %v185, %v186
  %v190 = vadd.f32 %v189, %v187
  %v191 = vadd.f32 %v190, %v188
  %v192 = vrot.slane %v191, 4
  %v193 = vadd.f32 %v191, %v192
  %v194 = vrot.slane %v193, 2
  %v195 = vadd.f32 %v193, %v194
  %v196 = vrot.slane %v195, 1
  %v197 = vadd.f32 %v195, %v196
  %199 = vrot.lane.b32.xlu0 %v197, 96
  %v200 = vpop.permute.xlu0 %199
  %v202 = vadd.f32 %v197, %v200
  %203 = vrot.lane.b32.xlu0 %v197, 64
  %v204 = vpop.permute.xlu0 %203
  %v206 = vadd.f32 %v202, %v204
  %207 = vrot.lane.b32.xlu0 %v197, 32
  %v208 = vpop.permute.xlu0 %207
  %v210 = vadd.f32 %v206, %v208
  %v211 = vmul.f32 %v210, 0.0078125
  %v212 = vld [vmem:[%s3] sm:$0x1]
  %v213 = vadd.f32 %v211, 1e-05
  %v214 = vrsqrt.pop %v213
  %v215 = vmul.f32 %v212, %v214
  %v217 = vlaneseq
  %v218 = vshrl.u32 %v217, 7
  %v219 = vsub.s32 0, %v218
  %v220 = vrot.slane %v215, %v219
  %221 = vrot.lane.b32.xlu0 %v220, 32
  %v222 = vpop.permute.xlu0 %221
  %224 = vrot.lane.b32.xlu0 %v220, 64
  %v225 = vpop.permute.xlu0 %224
  %227 = vrot.lane.b32.xlu0 %v220, 96
  %v228 = vpop.permute.xlu0 %227
  %v230 = vsel %vm171, %v215, %v222
  %v231 = vsel %vm173, %v230, %v225
  %v232 = vsel %vm175, %v231, %v228
  %v233 = vld [vmem:[%s4] sm:$0x1]
  %v235 = vlaneseq
  %v236 = vshrl.u32 %v235, 7
  %v237 = vsub.s32 0, %v236
  %v238 = vrot.slane %v233, %v237
  %239 = vrot.lane.b32.xlu0 %v238, 32
  %v240 = vpop.permute.xlu0 %239
  %242 = vrot.lane.b32.xlu0 %v238, 64
  %v243 = vpop.permute.xlu0 %242
  %245 = vrot.lane.b32.xlu0 %v238, 96
  %v246 = vpop.permute.xlu0 %245
  %v248 = vsel %vm171, %v233, %v240
  %v249 = vsel %vm173, %v248, %v243
  %v250 = vsel %vm175, %v249, %v246
  %v251 = vlaneseq
  %v252 = vshrl.u32 %v251, 7
  %v253 = vsub.s32 0, %v252
  %v254 = vrot.slane %v232, %v253
  %v255 = vmul.f32 %v181, %v254
  %v256 = vmul.f32 %v182, %v254
  %v257 = vmul.f32 %v183, %v254
  %v258 = vmul.f32 %v184, %v254
  %v259 = vlaneseq
  %v260 = vshrl.u32 %v259, 7
  %v261 = vsub.s32 0, %v260
  %v262 = vrot.slane %v250, %v261
  %v263 = vadd.f32 %v255, %v262
  %v264 = vadd.f32 %v256, %v262
  %v265 = vadd.f32 %v257, %v262
  %v266 = vadd.f32 %v258, %v262
  %v267 = vmax.f32 %v263, 0.0
  %v268 = vmax.f32 %v264, 0.0
  %v269 = vmax.f32 %v265, 0.0
  %v270 = vmax.f32 %v266, 0.0
  %271 = vst [vmem:[%s5] sm:$0xff] %v267
  %272 = vst [vmem:[%s5 + $0x8] sm:$0xff] %v268
  %273 = vst [vmem:[%s5 + $0x10] sm:$0xff] %v269
  %274 = vst [vmem:[%s5 + $0x18] sm:$0xff] %v270
  // Predicated region
  $region22: #{vae_forward.16} parent=0 // pred_check
    _
  $region23: #{vae_forward.16} parent=0 // pred_check_branch
    %276 = sbr.rel (0) target = $region25
  $region24: #{vae_forward.16} parent=0 // pred_region
    _
  $region25: #{vae_forward.16} parent=0 // pred_fallthru
    _
  // Predicated region
  $region26: #{vae_forward.16} parent=0 // pred_check
    _
  $region27: #{vae_forward.16} parent=0 // pred_check_branch
    %278 = sbr.rel (0) target = $region29
  $region28: #{vae_forward.16} parent=0 // pred_region
    _
  $region29: #{vae_forward.16} parent=0 // pred_fallthru
    _

// kernel: vae_forward.17
$region0: #{vae_forward.17}
  #allocation0 [shape = 'u32[]', space=smem, size = 0x4, offset = 0x4, fixed_abs, tag = 'smem constant byte address 0x4 - core index']
  #allocation1 [shape = 'u32[144,128]{1,0:T(1,128)}', space=vmem, size = 0x12000, scoped, tag = 'internal scratch']
  %s0 = inlined_call_operand.vmem [shape: f32[128,36], index: 0, kind: input, shape index: {}]
  %s1 = inlined_call_operand.vmem [shape: f32[36,128], index: 1, kind: input, shape index: {}]
  %s2 = inlined_call_operand.vmem [shape: f32[1,128], index: 2, kind: input, shape index: {}]
  %s3 = inlined_call_operand.vmem [shape: f32[128,128], index: 3, kind: output, shape index: {}]
  %s4 = sld [smem:[#allocation0]]
  $region22: #{vae_forward.17} parent=0
    _
  %s6 = ssub.s32 1, %s4
  %s7 = scalar_select 0, %s6, %s4
  // Predicated region
  $region2: #{vae_forward.17} parent=0 // pred_check
    _
  $region3: #{vae_forward.17} parent=0 // pred_check_branch
    %9 = sbr.rel (0) target = $region5
  $region4: #{vae_forward.17} parent=0 // pred_region
    _
  $region5: #{vae_forward.17} parent=0 // pred_fallthru
    _
  // Predicated region
  $region6: #{vae_forward.17} parent=0 // pred_check
    _
  $region7: #{vae_forward.17} parent=0 // pred_check_branch
    %11 = sbr.rel (0) target = $region9
  $region8: #{vae_forward.17} parent=0 // pred_region
    _
  $region9: #{vae_forward.17} parent=0 // pred_fallthru
    _
  // Predicated region
  $region10: #{vae_forward.17} parent=0 // pred_check
    _
  $region11: #{vae_forward.17} parent=0 // pred_check_branch
    %13 = sbr.rel (0) target = $region13
  $region12: #{vae_forward.17} parent=0 // pred_region
    _
  $region13: #{vae_forward.17} parent=0 // pred_fallthru
    _
  %v14 = vld [vmem:[%s0] sm:$0xff]
  %v15 = vld [vmem:[%s0 + $0x8] sm:$0xff]
  %v16 = vld [vmem:[%s0 + $0x10] sm:$0xff]
  %v17 = vld [vmem:[%s0 + $0x18] sm:$0xff]
  %v18 = vld [vmem:[%s0 + $0x20] sm:$0xff]
  %v19 = vld [vmem:[%s0 + $0x28] sm:$0xff]
  %v20 = vld [vmem:[%s0 + $0x30] sm:$0xff]
  %v21 = vld [vmem:[%s0 + $0x38] sm:$0xff]
  %v22 = vld [vmem:[%s0 + $0x40] sm:$0xff]
  %v23 = vld [vmem:[%s0 + $0x48] sm:$0xff]
  %v24 = vld [vmem:[%s0 + $0x50] sm:$0xff]
  %v25 = vld [vmem:[%s0 + $0x58] sm:$0xff]
  %v26 = vld [vmem:[%s0 + $0x60] sm:$0xff]
  %v27 = vld [vmem:[%s0 + $0x68] sm:$0xff]
  %v28 = vld [vmem:[%s0 + $0x70] sm:$0xff]
  %v29 = vld [vmem:[%s0 + $0x78] sm:$0xff]
  %v30 = vld [vmem:[%s1] sm:$0xff]
  %v31 = vld [vmem:[%s1 + $0x8] sm:$0xff]
  %v32 = vld [vmem:[%s1 + $0x10] sm:$0xff]
  %v33 = vld [vmem:[%s1 + $0x18] sm:$0xff]
  %v34 = vld [vmem:[%s1 + $0x20] sm:$0xf]
  %v35 = vld [vmem:[%s2] sm:$0x1]
  %v37 = vlaneseq
  %v38 = vshrl.u32 %v37, 7
  %v39 = vsub.s32 0, %v38
  %v40 = vrot.slane %v35, %v39
  %vm42 = vcmask 293888
  %v44 = vsel %vm42, %v14, 0
  %v47 = vsel %vm42, %v15, 0
  %v50 = vsel %vm42, %v16, 0
  %v53 = vsel %vm42, %v17, 0
  %v56 = vsel %vm42, %v18, 0
  %v59 = vsel %vm42, %v19, 0
  %v62 = vsel %vm42, %v20, 0
  %v65 = vsel %vm42, %v21, 0
  %v68 = vsel %vm42, %v22, 0
  %v71 = vsel %vm42, %v23, 0
  %v74 = vsel %vm42, %v24, 0
  %v77 = vsel %vm42, %v25, 0
  %v80 = vsel %vm42, %v26, 0
  %v83 = vsel %vm42, %v27, 0
  %v86 = vsel %vm42, %v28, 0
  %v89 = vsel %vm42, %v29, 0
  %vm91 = vcmask 1043456
  %v93 = vsel %vm91, %v34, 0
  %95 = vmatprep.subr.mxu0 0.0
  %96 = vmatpush1.msra.mxu0 0.0
  %97 = vmatprep.subr.mxu0 0.0
  %98 = vmatpush1.msra.mxu0 0.0
  %99 = vmatprep.subr.mxu0 0.0
  %100 = vmatpush1.msra.mxu0 0.0
  %101 = vmatprep.subr.mxu0 0.0
  %102 = vmatpush1.msra.mxu0 0.0
  %103 = vmatprep.subr.mxu0 0.0
  %104 = vmatpush1.msra.mxu0 0.0
  %105 = vmatprep.subr.mxu0 0.0
  %106 = vmatpush1.msra.mxu0 0.0
  %107 = vmatprep.subr.mxu0 0.0
  %108 = vmatpush1.msra.mxu0 0.0
  %109 = vmatprep.subr.mxu0 0.0
  %110 = vmatpush1.msra.mxu0 0.0
  %111 = vmatprep.subr.mxu0 0.0
  %112 = vmatpush1.msra.mxu0 0.0
  %113 = vmatprep.subr.mxu0 0.0
  %114 = vmatpush1.msra.mxu0 0.0
  %115 = vmatprep.subr.mxu0 0.0
  %116 = vmatpush1.msra.mxu0 0.0
  %117 = vmatprep.subr.mxu0 0.0
  %118 = vmatpush1.msra.mxu0 %v93
  %119 = vmatprep.subr.mxu0 0.0
  %120 = vmatpush1.msra.mxu0 %v33
  %121 = vmatprep.subr.mxu0 0.0
  %122 = vmatpush1.msra.mxu0 %v32
  %123 = vmatprep.subr.mxu0 0.0
  %124 = vmatpush1.msra.mxu0 %v31
  %125 = vmatprep.subr.mxu0 0.0
  %126 = vmatpush1.msra.mxu0 %v30
  %127 = vmatprep.subr.mxu0 0.0
  %128 = vmatpush2.msra.mxu0 0.0
  %129 = vmatprep.subr.mxu0 0.0
  %130 = vmatpush2.msra.mxu0 0.0
  %131 = vmatprep.subr.mxu0 0.0
  %132 = vmatpush2.msra.mxu0 0.0
  %133 = vmatprep.subr.mxu0 0.0
  %134 = vmatpush2.msra.mxu0 0.0
  %135 = vmatprep.subr.mxu0 0.0
  %136 = vmatpush2.msra.mxu0 0.0
  %137 = vmatprep.subr.mxu0 0.0
  %138 = vmatpush2.msra.mxu0 0.0
  %139 = vmatprep.subr.mxu0 0.0
  %140 = vmatpush2.msra.mxu0 0.0
  %141 = vmatprep.subr.mxu0 0.0
  %142 = vmatpush2.msra.mxu0 0.0
  %143 = vmatprep.subr.mxu0 0.0
  %144 = vmatpush2.msra.mxu0 0.0
  %145 = vmatprep.subr.mxu0 0.0
  %146 = vmatpush2.msra.mxu0 0.0
  %147 = vmatprep.subr.mxu0 0.0
  %148 = vmatpush2.msra.mxu0 0.0
  %149 = vmatprep.subr.mxu0 0.0
  %150 = vmatpush2.msra.mxu0 0.0
  %151 = vmatprep.subr.mxu0 0.0
  %152 = vmatpush2.msra.mxu0 0.0
  %153 = vmatprep.subr.mxu0 0.0
  %154 = vmatpush2.msra.mxu0 0.0
  %155 = vmatprep.subr.mxu0 0.0
  %156 = vmatpush2.msra.mxu0 0.0
  %157 = vmatprep.subr.mxu0 0.0
  %158 = vmatpush2.msra.mxu0 0.0
  %159 = vmatprep.mubr.f32.mxu0 0.0
  %160 = vmatmul.mubr.f32.gmra.mxu0 %v44
  %v161 = vpop.f32.mrf.mxu0
  %v162 = vadd.f32 %v40, %v161
  %v163 = vpop.f32.mrf.mxu0
  %164 = vmatprep.mubr.f32.mxu0 0.0
  %165 = vmatmul.mubr.f32.gmra.mxu0 %v47
  %v166 = vpop.f32.mrf.mxu0
  %v167 = vadd.f32 %v40, %v166
  %v168 = vpop.f32.mrf.mxu0
  %169 = vmatprep.mubr.f32.mxu0 0.0
  %170 = vmatmul.mubr.f32.gmra.mxu0 %v50
  %v171 = vpop.f32.mrf.mxu0
  %v172 = vadd.f32 %v40, %v171
  %v173 = vpop.f32.mrf.mxu0
  %174 = vmatprep.mubr.f32.mxu0 0.0
  %175 = vmatmul.mubr.f32.gmra.mxu0 %v53
  %v176 = vpop.f32.mrf.mxu0
  %v177 = vadd.f32 %v40, %v176
  %v178 = vpop.f32.mrf.mxu0
  %179 = vmatprep.mubr.f32.mxu0 0.0
  %180 = vmatmul.mubr.f32.gmra.mxu0 %v56
  %v181 = vpop.f32.mrf.mxu0
  %v182 = vadd.f32 %v40, %v181
  %v183 = vpop.f32.mrf.mxu0
  %184 = vmatprep.mubr.f32.mxu0 0.0
  %185 = vmatmul.mubr.f32.gmra.mxu0 %v59
  %v186 = vpop.f32.mrf.mxu0
  %v187 = vadd.f32 %v40, %v186
  %v188 = vpop.f32.mrf.mxu0
  %189 = vmatprep.mubr.f32.mxu0 0.0
  %190 = vmatmul.mubr.f32.gmra.mxu0 %v62
  %v191 = vpop.f32.mrf.mxu0
  %v192 = vadd.f32 %v40, %v191
  %v193 = vpop.f32.mrf.mxu0
  %194 = vmatprep.mubr.f32.mxu0 0.0
  %195 = vmatmul.mubr.f32.gmra.mxu0 %v65
  %v196 = vpop.f32.mrf.mxu0
  %v197 = vadd.f32 %v40, %v196
  %v198 = vpop.f32.mrf.mxu0
  %199 = vmatprep.mubr.f32.mxu0 0.0
  %200 = vmatmul.mubr.f32.gmra.mxu0 %v68
  %v201 = vpop.f32.mrf.mxu0
  %v202 = vadd.f32 %v40, %v201
  %v203 = vpop.f32.mrf.mxu0
  %204 = vmatprep.mubr.f32.mxu0 0.0
  %205 = vmatmul.mubr.f32.gmra.mxu0 %v71
  %v206 = vpop.f32.mrf.mxu0
  %v207 = vadd.f32 %v40, %v206
  %v208 = vpop.f32.mrf.mxu0
  %209 = vmatprep.mubr.f32.mxu0 0.0
  %210 = vmatmul.mubr.f32.gmra.mxu0 %v74
  %v211 = vpop.f32.mrf.mxu0
  %v212 = vadd.f32 %v40, %v211
  %v213 = vpop.f32.mrf.mxu0
  %214 = vmatprep.mubr.f32.mxu0 0.0
  %215 = vmatmul.mubr.f32.gmra.mxu0 %v77
  %v216 = vpop.f32.mrf.mxu0
  %v217 = vadd.f32 %v40, %v216
  %v218 = vpop.f32.mrf.mxu0
  %219 = vmatprep.mubr.f32.mxu0 0.0
  %220 = vmatmul.mubr.f32.gmra.mxu0 %v80
  %v221 = vpop.f32.mrf.mxu0
  %v222 = vadd.f32 %v40, %v221
  %v223 = vpop.f32.mrf.mxu0
  %224 = vmatprep.mubr.f32.mxu0 0.0
  %225 = vmatmul.mubr.f32.gmra.mxu0 %v83
  %v226 = vpop.f32.mrf.mxu0
  %v227 = vadd.f32 %v40, %v226
  %v228 = vpop.f32.mrf.mxu0
  %229 = vmatprep.mubr.f32.mxu0 0.0
  %230 = vmatmul.mubr.f32.gmra.mxu0 %v86
  %v231 = vpop.f32.mrf.mxu0
  %v232 = vadd.f32 %v40, %v231
  %v233 = vpop.f32.mrf.mxu0
  %234 = vmatprep.mubr.f32.mxu0 0.0
  %235 = vmatmul.mubr.f32.gmra.mxu0 %v89
  %v236 = vpop.f32.mrf.mxu0
  %v237 = vadd.f32 %v40, %v236
  %v238 = vpop.f32.mrf.mxu0
  %239 = vdwg.mxu0
  %v240 = vxor.u32 %v162, 2147483648
  %v241 = vxor.u32 %v167, 2147483648
  %v242 = vxor.u32 %v172, 2147483648
  %v243 = vxor.u32 %v177, 2147483648
  %v244 = vxor.u32 %v182, 2147483648
  %v245 = vxor.u32 %v187, 2147483648
  %v246 = vxor.u32 %v192, 2147483648
  %v247 = vxor.u32 %v197, 2147483648
  %v248 = vxor.u32 %v202, 2147483648
  %v249 = vxor.u32 %v207, 2147483648
  %v250 = vxor.u32 %v212, 2147483648
  %v251 = vxor.u32 %v217, 2147483648
  %v252 = vxor.u32 %v222, 2147483648
  %v253 = vxor.u32 %v227, 2147483648
  %v254 = vxor.u32 %v232, 2147483648
  %v255 = vxor.u32 %v237, 2147483648
  %v256 = vmul.f32 %v240, 1.442695
  %v257 = vpow.pop %v256
  %v258 = vmul.f32 %v241, 1.442695
  %v259 = vpow.pop %v258
  %v260 = vmul.f32 %v242, 1.442695
  %v261 = vpow.pop %v260
  %v262 = vmul.f32 %v243, 1.442695
  %v263 = vpow.pop %v262
  %v264 = vmul.f32 %v244, 1.442695
  %v265 = vpow.pop %v264
  %v266 = vmul.f32 %v245, 1.442695
  %v267 = vpow.pop %v266
  %v268 = vmul.f32 %v246, 1.442695
  %v269 = vpow.pop %v268
  %v270 = vmul.f32 %v247, 1.442695
  %v271 = vpow.pop %v270
  %v272 = vmul.f32 %v248, 1.442695
  %v273 = vpow.pop %v272
  %v274 = vmul.f32 %v249, 1.442695
  %v275 = vpow.pop %v274
  %v276 = vmul.f32 %v250, 1.442695
  %v277 = vpow.pop %v276
  %v278 = vmul.f32 %v251, 1.442695
  %v279 = vpow.pop %v278
  %v280 = vmul.f32 %v252, 1.442695
  %v281 = vpow.pop %v280
  %v282 = vmul.f32 %v253, 1.442695
  %v283 = vpow.pop %v282
  %v284 = vmul.f32 %v254, 1.442695
  %v285 = vpow.pop %v284
  %v286 = vmul.f32 %v255, 1.442695
  %v287 = vpow.pop %v286
  %v288 = vadd.f32 %v257, 1.0
  %v289 = vadd.f32 %v259, 1.0
  %v290 = vadd.f32 %v261, 1.0
  %v291 = vadd.f32 %v263, 1.0
  %v292 = vadd.f32 %v265, 1.0
  %v293 = vadd.f32 %v267, 1.0
  %v294 = vadd.f32 %v269, 1.0
  %v295 = vadd.f32 %v271, 1.0
  %v296 = vadd.f32 %v273, 1.0
  %v297 = vadd.f32 %v275, 1.0
  %v298 = vadd.f32 %v277, 1.0
  %v299 = vadd.f32 %v279, 1.0
  %v300 = vadd.f32 %v281, 1.0
  %v301 = vadd.f32 %v283, 1.0
  %v302 = vadd.f32 %v285, 1.0
  %v303 = vadd.f32 %v287, 1.0
  %v304 = vrcp.pop %v288
  %v305 = vmul.f32 1.0, %v304
  %v306 = vrcp.pop %v289
  %v307 = vmul.f32 1.0, %v306
  %v308 = vrcp.pop %v290
  %v309 = vmul.f32 1.0, %v308
  %v310 = vrcp.pop %v291
  %v311 = vmul.f32 1.0, %v310
  %v312 = vrcp.pop %v292
  %v313 = vmul.f32 1.0, %v312
  %v314 = vrcp.pop %v293
  %v315 = vmul.f32 1.0, %v314
  %v316 = vrcp.pop %v294
  %v317 = vmul.f32 1.0, %v316
  %v318 = vrcp.pop %v295
  %v319 = vmul.f32 1.0, %v318
  %v320 = vrcp.pop %v296
  %v321 = vmul.f32 1.0, %v320
  %v322 = vrcp.pop %v297
  %v323 = vmul.f32 1.0, %v322
  %v324 = vrcp.pop %v298
  %v325 = vmul.f32 1.0, %v324
  %v326 = vrcp.pop %v299
  %v327 = vmul.f32 1.0, %v326
  %v328 = vrcp.pop %v300
  %v329 = vmul.f32 1.0, %v328
  %v330 = vrcp.pop %v301
  %v331 = vmul.f32 1.0, %v330
  %v332 = vrcp.pop %v302
  %v333 = vmul.f32 1.0, %v332
  %v334 = vrcp.pop %v303
  %v335 = vmul.f32 1.0, %v334
  %336 = vst [vmem:[%s3] sm:$0xff] %v305
  %337 = vst [vmem:[%s3 + $0x8] sm:$0xff] %v307
  %338 = vst [vmem:[%s3 + $0x10] sm:$0xff] %v309
  %339 = vst [vmem:[%s3 + $0x18] sm:$0xff] %v311
  %340 = vst [vmem:[%s3 + $0x20] sm:$0xff] %v313
  %341 = vst [vmem:[%s3 + $0x28] sm:$0xff] %v315
  %342 = vst [vmem:[%s3 + $0x30] sm:$0xff] %v317
  %343 = vst [vmem:[%s3 + $0x38] sm:$0xff] %v319
  %344 = vst [vmem:[%s3 + $0x40] sm:$0xff] %v321
  %345 = vst [vmem:[%s3 + $0x48] sm:$0xff] %v323
  %346 = vst [vmem:[%s3 + $0x50] sm:$0xff] %v325
  %347 = vst [vmem:[%s3 + $0x58] sm:$0xff] %v327
  %348 = vst [vmem:[%s3 + $0x60] sm:$0xff] %v329
  %349 = vst [vmem:[%s3 + $0x68] sm:$0xff] %v331
  %350 = vst [vmem:[%s3 + $0x70] sm:$0xff] %v333
  %351 = vst [vmem:[%s3 + $0x78] sm:$0xff] %v335
  // Predicated region
  $region14: #{vae_forward.17} parent=0 // pred_check
    _
  $region15: #{vae_forward.17} parent=0 // pred_check_branch
    %353 = sbr.rel (0) target = $region17
  $region16: #{vae_forward.17} parent=0 // pred_region
    _
  $region17: #{vae_forward.17} parent=0 // pred_fallthru
    _
  // Predicated region
  $region18: #{vae_forward.17} parent=0 // pred_check
    _
  $region19: #{vae_forward.17} parent=0 // pred_check_branch
    %355 = sbr.rel (0) target = $region21
  $region20: #{vae_forward.17} parent=0 // pred_region
    _
  $region21: #{vae_forward.17} parent=0 // pred_fallthru
    _

</llo_original>
